<compile_context>
chip_gen: v6e
topology: v6e:2x2x1
jax: 0.10.0
libtpu: 0.0.40
codegen_flags: <defaults>
</compile_context>

<pallas_src>
import functools

import jax
import jax.numpy as jnp
from jax.experimental import pallas as pl
from jax.experimental.pallas import tpu as pltpu


def _round_up(v, m):
    return ((v + m - 1) // m) * m


def _vmem_capacity_bytes():
    try:
        return int(pltpu.get_tpu_info().vmem_capacity_bytes)
    except Exception:
        return 64 * 2 ** 20          # v7x-safe fallback


# ----------------------------------------------------------------------------
# Fused kernel: [optional input Conv1d] + nblk ResBlocks over one (batch, L-tile)
# grid cell.  All inter-stage activations live in VMEM scratch.
# ----------------------------------------------------------------------------
def _fused_encoder_kernel(*refs, has_input_conv, nblk, num_layers, K, pad, HP, TL,
                          L_true, res_rate, c_pad, compute_dtype, n_act):
    it = iter(refs)
    xl_ref = next(it); xc_ref = next(it); xr_ref = next(it)
    w_in_ref = next(it) if has_input_conv else None
    b_in_ref = next(it) if has_input_conv else None
    w_blk_ref = next(it) if nblk > 0 else None       # (nblk*num_layers, K*c_pad, c_pad)
    b_blk_ref = next(it) if nblk > 0 else None       # (nblk*num_layers, 1, c_pad) f32
    o_ref = next(it)
    xbuf_ref = next(it)                               # (2*HP+TL, Cin_in)
    act_refs = [next(it) for _ in range(n_act)]       # (Wmax, c_pad) each
    wbuf_ref = next(it) if nblk > 0 else None         # (Wmax, K*c_pad)

    depth = (1 if has_input_conv else 0) + nblk * num_layers
    halo = depth * pad

    l_id = pl.program_id(1)
    start = l_id * TL
    # Only boundary tiles have window positions outside [0, L_true): tile 0 (left edge) and
    # any tile whose right reach (incl. halo) crosses L_true.  Clamped duplicate halo blocks
    # only occur on exactly these tiles, so gating the mask here is safe.
    needs_mask = jnp.logical_or(l_id == 0, (l_id + 1) * TL + halo > L_true)

    def mask_to_seq(v, lead_halo):
        # Zero rows whose global position (start - lead_halo + i) lies outside [0, L_true);
        # this implements the zero "same" padding at sequence edges.
        pos = (start - lead_halo) + jax.lax.broadcasted_iota(jnp.int32, (v.shape[0], 1), 0)
        keep = jnp.logical_and(pos >= 0, pos < L_true)
        return jnp.where(keep, v, jnp.zeros_like(v))

    # ---- assemble [left halo | centre | right halo]; interior tiles skip the mask RMW.
    xbuf_ref[0:HP, :] = xl_ref[...]
    xbuf_ref[HP:HP + TL, :] = xc_ref[...]
    xbuf_ref[HP + TL:2 * HP + TL, :] = xr_ref[...]

    @pl.when(needs_mask)
    def _():
        xbuf_ref[...] = mask_to_seq(xbuf_ref[...], HP)

    def store_act(dst_ref, lout, acc, lead_halo):
        dst_ref[0:lout, :] = acc.astype(compute_dtype)

        @pl.when(needs_mask)   # re-apply sequence-edge zero padding (boundary tiles only)
        def _():
            dst_ref[0:lout, :] = mask_to_seq(dst_ref[0:lout, :], lead_halo)

    def pick_dest(*exclude):
        ex = {id(r) for r in exclude if r is not None}
        for r in act_refs:
            if id(r) not in ex:
                return r
        raise AssertionError("no free activation buffer")

    def conv_fused(src_ref, base, lout, li):
        # ONE MXU matmul with contraction depth K*c_pad: stage the K shifted views at
        # 128-aligned column offsets of wbuf, then a single dot.  Requires Cin==Cout==c_pad.
        for k in range(K):
            wbuf_ref[0:lout, k * c_pad:(k + 1) * c_pad] = src_ref[base + k:base + k + lout, :]
        acc = jnp.dot(wbuf_ref[0:lout, :], w_blk_ref[li],
                      preferred_element_type=jnp.float32)
        return acc + b_blk_ref[li].astype(jnp.float32)

    def conv_input(lout):
        # Raw network input (Cin small / not 128-aligned): K shifted matmuls.
        base = HP - halo
        acc = jnp.dot(xbuf_ref[base:base + lout, :], w_in_ref[0],
                      preferred_element_type=jnp.float32)
        for k in range(1, K):
            acc = acc + jnp.dot(xbuf_ref[base + k:base + k + lout, :], w_in_ref[k],
                                preferred_element_type=jnp.float32)
        return acc + b_in_ref[0].astype(jnp.float32)

    # ---- stage 0: input Conv1d (bias, no activation)
    if has_input_conv:
        cur_halo = halo - pad
        cur_len = TL + 2 * cur_halo
        acc = conv_input(cur_len)
        cur_ref, cur_base = act_refs[0], 0
        store_act(cur_ref, cur_len, acc, cur_halo)
    else:
        cur_ref, cur_base = xbuf_ref, HP - halo
        cur_halo, cur_len = halo, TL + 2 * halo

    # ---- ResBlocks: h = x; repeat: h = ReLU(Conv1d(h)); out = x + res_rate * h
    for b in range(nblk):
        blk_in_ref, blk_in_base = cur_ref, cur_base
        src_ref, src_base, src_len, src_halo = cur_ref, cur_base, cur_len, cur_halo
        for j in range(num_layers):
            li = b * num_layers + j
            lout = src_len - (K - 1)
            out_halo = src_halo - pad
            acc = conv_fused(src_ref, src_base, lout, li)
            acc = jnp.maximum(acc, 0.0)                       # ReLU (f32)
            if j == num_layers - 1:
                roff = blk_in_base + num_layers * pad
                resid = blk_in_ref[roff:roff + lout, :].astype(jnp.float32)
                acc = resid + res_rate * acc                  # residual add (f32)
            dst_ref = pick_dest(src_ref, blk_in_ref)          # never write a buffer we read
            store_act(dst_ref, lout, acc, out_halo)
            src_ref, src_base, src_len, src_halo = dst_ref, 0, lout, out_halo
        cur_ref, cur_base, cur_len, cur_halo = src_ref, 0, src_len, src_halo

    # halo fully consumed -> exactly TL rows remain
    o_ref[...] = cur_ref[cur_base:cur_base + TL, :].astype(o_ref.dtype)


# ----------------------------------------------------------------------------
# Wrapper: one pallas_call for (optional input conv) + a group of ResBlocks.
# ----------------------------------------------------------------------------
def cnn_stack_pallas(x_nlc, *, w_in, b_in, w_blk, b_blk, K, pad, num_layers,
                     L_true, TL, HP, res_rate, c_pad, compute_dtype, vmem_limit):
    N, L_padded, Cin_in = x_nlc.shape
    has_input_conv = w_in is not None
    nblk = 0 if w_blk is None else w_blk.shape[0] // num_layers
    assert has_input_conv or nblk > 0
    assert 2 * pad == K - 1
    if w_blk is not None:
        # Fused K*Cin-contraction path requires Cin == Cout == c_pad.
        assert w_blk.shape == (nblk * num_layers, K * c_pad, c_pad), w_blk.shape
        assert b_blk.shape == (nblk * num_layers, 1, c_pad)
    if has_input_conv:
        assert w_in.shape == (K, Cin_in, c_pad)
    else:
        assert Cin_in == c_pad

    depth = (1 if has_input_conv else 0) + nblk * num_layers
    halo = depth * pad
    assert halo <= HP <= TL and TL % HP == 0 and L_padded % TL == 0 and TL % 8 == 0
    NT = L_padded // TL
    R = TL // HP
    NB = L_padded // HP
    Wmax = TL + 2 * max(halo - pad, 0)
    n_act = 1 if nblk == 0 else (2 if num_layers == 1 else 3)

    kernel = functools.partial(
        _fused_encoder_kernel, has_input_conv=has_input_conv, nblk=nblk,
        num_layers=num_layers, K=K, pad=pad, HP=HP, TL=TL, L_true=L_true,
        res_rate=float(res_rate), c_pad=c_pad, compute_dtype=compute_dtype, n_act=n_act)

    in_specs = [
        pl.BlockSpec((None, HP, Cin_in), lambda n, l: (n, jnp.maximum(l * R - 1, 0), 0)),
        pl.BlockSpec((None, TL, Cin_in), lambda n, l: (n, l, 0)),
        pl.BlockSpec((None, HP, Cin_in), lambda n, l: (n, jnp.minimum(l * R + R, NB - 1), 0)),
    ]
    args = [x_nlc, x_nlc, x_nlc]
    weight_bytes = 0
    # Weights/biases: constant index_map -> fetched into VMEM once and kept resident.
    # TODO(synk): pipeline_mode=pl.Buffered(1) here would halve the resident footprint.
    if has_input_conv:
        in_specs += [pl.BlockSpec(w_in.shape, lambda n, l: (0, 0, 0)),
                     pl.BlockSpec(b_in.shape, lambda n, l: (0, 0, 0))]
        args += [w_in, b_in]
        weight_bytes += w_in.size * w_in.dtype.itemsize + b_in.size * b_in.dtype.itemsize
    if nblk > 0:
        in_specs += [pl.BlockSpec(w_blk.shape, lambda n, l: (0, 0, 0)),
                     pl.BlockSpec(b_blk.shape, lambda n, l: (0, 0, 0))]
        args += [w_blk, b_blk]
        weight_bytes += w_blk.size * w_blk.dtype.itemsize + b_blk.size * b_blk.dtype.itemsize

    out_specs = pl.BlockSpec((None, TL, c_pad), lambda n, l: (n, l, 0))

    scratch = [pltpu.VMEM((2 * HP + TL, Cin_in), compute_dtype)]                 # xbuf
    scratch += [pltpu.VMEM((Wmax, c_pad), compute_dtype) for _ in range(n_act)]  # activations
    if nblk > 0:
        scratch += [pltpu.VMEM((Wmax, K * c_pad), compute_dtype)]                # conv window

    itemsize = jnp.dtype(compute_dtype).itemsize
    flops = 2 * N * L_padded * ((K * Cin_in * c_pad if has_input_conv else 0)
                                + nblk * num_layers * K * c_pad * c_pad)
    bytes_accessed = (x_nlc.size * x_nlc.dtype.itemsize
                      + N * L_padded * c_pad * itemsize + weight_bytes)
    cost = pl.CostEstimate(flops=flops, transcendentals=0, bytes_accessed=bytes_accessed)

    return pl.pallas_call(
        kernel,
        out_shape=jax.ShapeDtypeStruct((N, L_padded, c_pad), compute_dtype),
        grid=(N, NT),
        in_specs=in_specs,
        out_specs=out_specs,
        scratch_shapes=scratch,
        compiler_params=pltpu.CompilerParams(
            dimension_semantics=("parallel", "parallel"),
            vmem_limit_bytes=int(vmem_limit)),
        cost_estimate=cost,
    )(*args)


# ----------------------------------------------------------------------------
# CNNEncoder in JAX: input conv + ResBlocks fused into as few pallas_calls as
# the (generation-aware) VMEM weight budget allows.
# ----------------------------------------------------------------------------
class CNNEncoderPallas:
    def __init__(self, num_blocks, in_channels, out_channels, kernel_size, res_rate,
                 num_layers, stride=1, padding=1, dilation=1, groups=1, bias=True,
                 padding_mode="zeros", compute_dtype=jnp.bfloat16, tile_l=4096,
                 max_blocks_per_call=None, key=None):
        assert stride == 1 and dilation == 1 and groups == 1, \
            "only stride=1, dilation=1, groups=1 supported"
        assert padding_mode == "zeros"
        # Length-preserving convs are required by the residual adds inside ResBlock.
        assert 2 * padding == kernel_size - 1, "need 2*padding == kernel_size - 1"
        self.num_blocks = num_blocks
        self.in_channels = in_channels
        self.out_channels = out_channels
        self.kernel_size = kernel_size
        self.res_rate = res_rate
        self.num_layers = num_layers
        self.padding = padding
        self.compute_dtype = compute_dtype
        self.tile_l = tile_l
        self.max_blocks_per_call = max_blocks_per_call
        self.c_pad = _round_up(out_channels, 128)    # lane-dense channel width

        if key is None:
            key = jax.random.PRNGKey(0)

        def init_conv(k, cin, cout):
            kw, kb = jax.random.split(k)
            bound = 1.0 / (cin * kernel_size) ** 0.5    # PyTorch-style uniform init
            w = jax.random.uniform(kw, (kernel_size, cin, cout), jnp.float32, -bound, bound)
            b = (jax.random.uniform(kb, (cout,), jnp.float32, -bound, bound)
                 if bias else jnp.zeros((cout,), jnp.float32))
            return w, b

        keys = jax.random.split(key, 1 + max(num_blocks, 1) * num_layers)
        # Raw f32 parameters (kept for the pure-JAX reference).
        self.input_w, self.input_b = init_conv(keys[0], in_channels, out_channels)
        self.blocks_raw = []
        ki = 1
        for _ in range(num_blocks):
            layers = []
            for _ in range(num_layers):
                layers.append(init_conv(keys[ki], out_channels, out_channels))
                ki += 1
            self.blocks_raw.append(layers)

        # Kernel-side parameters: channel-padded, reshaped for the fused K*Cin contraction.
        c = self.c_pad
        wpad = jnp.zeros((kernel_size, in_channels, c), jnp.float32)
        wpad = wpad.at[:, :, :out_channels].set(self.input_w)
        self.w_in_k = wpad.astype(compute_dtype)                                   # (K, Cin, c)
        self.b_in_k = jnp.zeros((1, 1, c), jnp.float32).at[0, 0, :out_channels].set(self.input_b)

        self.w_blocks_k, self.b_blocks_k = [], []
        for layers in self.blocks_raw:
            ws, bs = [], []
            for w, bvec in layers:
                wp = jnp.zeros((kernel_size, c, c), jnp.float32)
                wp = wp.at[:, :out_channels, :out_channels].set(w)
                ws.append(wp.reshape(kernel_size * c, c))
                bs.append(jnp.zeros((c,), jnp.float32).at[:out_channels].set(bvec))
            self.w_blocks_k.append(jnp.stack(ws).astype(compute_dtype))            # (nl, K*c, c)
            self.b_blocks_k.append(jnp.stack(bs).reshape(num_layers, 1, c))        # f32

    # ---- planning: blocks fused per call, tile sizes, VMEM limit (generation-aware) ----
    def _plan(self, L):
        it = jnp.dtype(self.compute_dtype).itemsize
        c, K, nl, pad = self.c_pad, self.kernel_size, self.num_layers, self.padding
        cap = _vmem_capacity_bytes()
        budget = int(cap * 0.75)

        wb_block = nl * (K * c * c * it + 4 * c)
        wb_input = K * self.in_channels * c * it + 4 * c

        if self.num_blocks > 0:
            bpc = max(1, int((budget // 3) // max(2 * wb_block, 1)))   # resident-weight budget
            bpc = min(bpc, self.num_blocks)
            if self.max_blocks_per_call is not None:
                bpc = max(1, min(bpc, self.max_blocks_per_call))
            groups = [(True, bpc)]
            done = bpc
            while done < self.num_blocks:
                g = min(bpc, self.num_blocks - done)
                groups.append((False, g))
                done += g
        else:
            bpc = 0
            groups = [(True, 0)]

        max_depth = max((1 if has_in else 0) + g * nl for has_in, g in groups)
        halo = max_depth * pad
        HP = _round_up(max(halo, 8), 16)
        n_act = 1 if self.num_blocks == 0 else (2 if nl == 1 else 3)
        w_bytes_call = 2 * (wb_input + bpc * wb_block)

        def estimate(TL):
            Wmax = TL + 2 * max(halo - pad, 0)
            e = 2 * (TL + 2 * HP) * c * it        # halo + centre input blocks (double-buffered)
            e += 2 * TL * c * it                  # output blocks (double-buffered)
            e += w_bytes_call                     # resident weights
            e += (TL + 2 * HP) * c * it           # xbuf scratch
            e += n_act * Wmax * c * it            # inter-stage activation buffers
            e += Wmax * K * c * it                # conv-window staging buffer
            e += 3 * Wmax * c * 4                 # f32 temporaries (acc / residual)
            return e

        tl_target = max(HP, min(self.tile_l, _round_up(L, HP)))
        TL = max(HP, (tl_target // HP) * HP)
        while TL > HP and estimate(TL) > budget:
            TL = max(HP, ((TL // 2) // HP) * HP)

        L_padded = _round_up(L, TL)
        vmem_limit = int(min(max(estimate(TL) * 2, 32 * 2 ** 20), cap - 2 * 2 ** 20))
        return TL, HP, L_padded, groups, vmem_limit

    def __call__(self, x_ncl):
        N, Cin, L = x_ncl.shape
        assert Cin == self.in_channels
        TL, HP, L_padded, groups, vmem_limit = self._plan(L)

        x = jnp.transpose(x_ncl, (0, 2, 1)).astype(self.compute_dtype)   # NCL -> NLC
        if L_padded != L:
            x = jnp.pad(x, ((0, 0), (0, L_padded - L), (0, 0)))

        h = x
        blk = 0
        for has_in, g in groups:
            w_blk = jnp.concatenate(self.w_blocks_k[blk:blk + g], axis=0) if g > 0 else None
            b_blk = jnp.concatenate(self.b_blocks_k[blk:blk + g], axis=0) if g > 0 else None
            blk += g
            h = cnn_stack_pallas(
                h,
                w_in=self.w_in_k if has_in else None,
                b_in=self.b_in_k if has_in else None,
                w_blk=w_blk, b_blk=b_blk,
                K=self.kernel_size, pad=self.padding, num_layers=self.num_layers,
                L_true=L, TL=TL, HP=HP, res_rate=self.res_rate, c_pad=self.c_pad,
                compute_dtype=self.compute_dtype, vmem_limit=vmem_limit)

        out = h[:, :L, :self.out_channels].astype(x_ncl.dtype)
        # TODO(synk): for large out_channels, emit NCL directly from the last fused call.
        return jnp.transpose(out, (0, 2, 1))                             # back to (N, C, L)


# ----------------------------------------------------------------------------
# Pure-JAX reference (lax conv, f32) for the correctness check.
# ----------------------------------------------------------------------------
def _ref_conv1d(x_nlc, w_kico, b, padding):
    y = jax.lax.conv_general_dilated(
        x_nlc, w_kico, window_strides=(1,), padding=[(padding, padding)],
        dimension_numbers=("NWC", "WIO", "NWC"))
    return y + b.reshape(1, 1, -1)


def _ref_forward(model, x_ncl):
    x = jnp.transpose(x_ncl, (0, 2, 1)).astype(jnp.float32)
    h = _ref_conv1d(x, model.input_w, model.input_b, model.padding)
    for layers in model.blocks_raw:
        resid = h
        cur = h
        for w, b in layers:
            cur = jnp.maximum(_ref_conv1d(cur, w, b, model.padding), 0.0)
        h = resid + model.res_rate * cur
    return jnp.transpose(h, (0, 2, 1))


if __name__ == "__main__":
    key = jax.random.PRNGKey(0)
    k_x, k_p, k_x2 = jax.random.split(key, 3)

    # Small shapes consistent with the module: num_blocks=2, Cin=4, Cout=8,
    # kernel_size=3, res_rate=0.1, num_layers=2, stride=1, padding=1.
    N, Cin, L = 2, 4, 16
    x = jax.random.normal(k_x, (N, Cin, L), jnp.float32)      # (N, C, L), PyTorch layout
    cfg = dict(num_blocks=2, in_channels=Cin, out_channels=8, kernel_size=3,
               res_rate=0.1, num_layers=2, stride=1, padding=1, key=k_p)

    # f32 instance: tight numerical check of the fully fused kernel vs. the lax-conv reference.
    model_f32 = CNNEncoderPallas(compute_dtype=jnp.float32, **cfg)
    out_f32 = jax.block_until_ready(model_f32(x))
    ref = jax.block_until_ready(_ref_forward(model_f32, x))
    assert out_f32.shape == (N, 8, L), out_f32.shape
    err_f32 = float(jnp.max(jnp.abs(out_f32 - ref)))
    assert err_f32 < 2e-3, err_f32

    # bf16 instance (default performance path): same parameters, looser tolerance.
    # NOTE: inter-stage activations / residual source are bf16 (documented deviation).
    model_bf16 = CNNEncoderPallas(compute_dtype=jnp.bfloat16, **cfg)
    out_bf16 = jax.block_until_ready(model_bf16(x))
    err_bf16 = float(jnp.max(jnp.abs(out_bf16.astype(jnp.float32) - ref)))
    assert err_bf16 < 7.5e-2, err_bf16

    # Multi-tile + ragged L + multi-call grouping: exercises halos, boundary-gated masking
    # and the no-input-conv kernel variant (block group whose input is a previous call).
    N2, L2 = 1, 50
    x2 = jax.random.normal(k_x2, (N2, Cin, L2), jnp.float32)
    model_mt = CNNEncoderPallas(compute_dtype=jnp.float32, tile_l=16,
                                max_blocks_per_call=1, **cfg)
    out_mt = jax.block_until_ready(model_mt(x2))
    ref_mt = jax.block_until_ready(_ref_forward(model_mt, x2))
    err_mt = float(jnp.max(jnp.abs(out_mt - ref_mt)))
    assert err_mt < 2e-3, err_mt

    print("KERNEL_OK")
</pallas_src>

<mosaic_0001>
module attributes {stable_mosaic.version = 11 : i64} {
  func.func @_fused_encoder_kernel(%arg0: i32, %arg1: i32, %arg2: memref<1x16x4xf32, #tpu.memory_space<vmem>>, %arg3: memref<1x16x4xf32, #tpu.memory_space<vmem>>, %arg4: memref<1x16x4xf32, #tpu.memory_space<vmem>>, %arg5: memref<3x4x128xf32, #tpu.memory_space<vmem>>, %arg6: memref<1x1x128xf32, #tpu.memory_space<vmem>>, %arg7: memref<4x384x128xf32, #tpu.memory_space<vmem>>, %arg8: memref<4x1x128xf32, #tpu.memory_space<vmem>>, %arg9: memref<1x16x128xf32, #tpu.memory_space<vmem>>, %arg10: memref<48x4xf32, #tpu.memory_space<vmem>>, %arg11: memref<24x128xf32, #tpu.memory_space<vmem>>, %arg12: memref<24x128xf32, #tpu.memory_space<vmem>>, %arg13: memref<24x128xf32, #tpu.memory_space<vmem>>, %arg14: memref<24x384xf32, #tpu.memory_space<vmem>>) attributes {dimension_semantics = [#tpu.dimension_semantics<parallel>, #tpu.dimension_semantics<parallel>], iteration_bounds = array<i64: 2, 1>, scalar_prefetch = 0 : i64, scratch_operands = 5 : i64, tpu.core_type = #tpu.core_type<tc>, window_params = [{transform_indices = @transform_0, window_bounds = array<i64: 1, 16, 4>}, {transform_indices = @transform_1, window_bounds = array<i64: 1, 16, 4>}, {transform_indices = @transform_2, window_bounds = array<i64: 1, 16, 4>}, {pipeline_mode = #tpu.pipeline_mode<synchronous>, transform_indices = @transform_3, window_bounds = array<i64: 3, 4, 128>}, {pipeline_mode = #tpu.pipeline_mode<synchronous>, transform_indices = @transform_4, window_bounds = array<i64: 1, 1, 128>}, {pipeline_mode = #tpu.pipeline_mode<synchronous>, transform_indices = @transform_5, window_bounds = array<i64: 4, 384, 128>}, {pipeline_mode = #tpu.pipeline_mode<synchronous>, transform_indices = @transform_6, window_bounds = array<i64: 4, 1, 128>}, {transform_indices = @transform_7, window_bounds = array<i64: 1, 16, 128>}]} {
    %c16_i32 = arith.constant 16 : i32
    %0 = arith.muli %arg1, %c16_i32 : i32
    %c0_i32 = arith.constant 0 : i32
    %1 = arith.cmpi eq, %arg1, %c0_i32 : i32
    %c1_i32 = arith.constant 1 : i32
    %2 = arith.addi %arg1, %c1_i32 : i32
    %c16_i32_0 = arith.constant 16 : i32
    %3 = arith.muli %2, %c16_i32_0 : i32
    %c5_i32 = arith.constant 5 : i32
    %4 = arith.addi %3, %c5_i32 : i32
    %c16_i32_1 = arith.constant 16 : i32
    %5 = arith.cmpi sgt, %4, %c16_i32_1 : i32
    %6 = arith.ori %1, %5 : i1
    %c0 = arith.constant 0 : index
    %c0_2 = arith.constant 0 : index
    %c0_3 = arith.constant 0 : index
    %7 = vector.load %arg2[%c0, %c0_2, %c0_3] : memref<1x16x4xf32, #tpu.memory_space<vmem>>, vector<1x16x4xf32>
    %8 = vector.shape_cast %7 : vector<1x16x4xf32> to vector<16x4xf32>
    %c0_4 = arith.constant 0 : index
    %c0_5 = arith.constant 0 : index
    %9 = vector.load %arg10[%c0_4, %c0_5] : memref<48x4xf32, #tpu.memory_space<vmem>>, vector<16x4xf32>
    tpu.vector_store %arg10[%c0_4, %c0_5], %8 {strides = array<i32>} : memref<48x4xf32, #tpu.memory_space<vmem>>, vector<16x4xf32>,
    %c0_6 = arith.constant 0 : index
    %c0_7 = arith.constant 0 : index
    %c0_8 = arith.constant 0 : index
    %10 = vector.load %arg3[%c0_6, %c0_7, %c0_8] : memref<1x16x4xf32, #tpu.memory_space<vmem>>, vector<1x16x4xf32>
    %11 = vector.shape_cast %10 : vector<1x16x4xf32> to vector<16x4xf32>
    %c16 = arith.constant 16 : index
    %c0_9 = arith.constant 0 : index
    %12 = vector.load %arg10[%c16, %c0_9] : memref<48x4xf32, #tpu.memory_space<vmem>>, vector<16x4xf32>
    tpu.vector_store %arg10[%c16, %c0_9], %11 {strides = array<i32>} : memref<48x4xf32, #tpu.memory_space<vmem>>, vector<16x4xf32>,
    %c0_10 = arith.constant 0 : index
    %c0_11 = arith.constant 0 : index
    %c0_12 = arith.constant 0 : index
    %13 = vector.load %arg4[%c0_10, %c0_11, %c0_12] : memref<1x16x4xf32, #tpu.memory_space<vmem>>, vector<1x16x4xf32>
    %14 = vector.shape_cast %13 : vector<1x16x4xf32> to vector<16x4xf32>
    %c32 = arith.constant 32 : index
    %c0_13 = arith.constant 0 : index
    %15 = vector.load %arg10[%c32, %c0_13] : memref<48x4xf32, #tpu.memory_space<vmem>>, vector<16x4xf32>
    tpu.vector_store %arg10[%c32, %c0_13], %14 {strides = array<i32>} : memref<48x4xf32, #tpu.memory_space<vmem>>, vector<16x4xf32>,
    %16 = arith.extui %6 : i1 to i32
    %c0_i32_14 = arith.constant 0 : i32
    %17 = arith.cmpi ne, %16, %c0_i32_14 : i32
    scf.if %17 {
      %c0_141 = arith.constant 0 : index
      %c0_142 = arith.constant 0 : index
      %127 = vector.load %arg10[%c0_141, %c0_142] : memref<48x4xf32, #tpu.memory_space<vmem>>, vector<48x4xf32>
      %c16_i32_143 = arith.constant 16 : i32
      %128 = arith.subi %0, %c16_i32_143 : i32
      %129 = tpu.iota {dimensions = array<i32: 0>} : vector<48x1xi32>
      %130 = vector.broadcast %128 : i32 to vector<48x1xi32>
      %131 = arith.addi %130, %129 : vector<48x1xi32>
      %c0_i32_144 = arith.constant 0 : i32
      %132 = vector.broadcast %c0_i32_144 : i32 to vector<48x1xi32>
      %133 = arith.cmpi sge, %131, %132 : vector<48x1xi32>
      %c16_i32_145 = arith.constant 16 : i32
      %134 = vector.broadcast %c16_i32_145 : i32 to vector<48x1xi32>
      %135 = arith.cmpi slt, %131, %134 : vector<48x1xi32>
      %136 = arith.andi %133, %135 : vector<48x1xi1>
      %cst_146 = arith.constant 0.000000e+00 : f32
      %137 = vector.broadcast %cst_146 : f32 to vector<48x4xf32>
      %138 = vector.shape_cast %136 : vector<48x1xi1> to vector<48x1xi1>
      %139 = vector.broadcast %138 : vector<48x1xi1> to vector<48x4xi1>
      %140 = arith.select %139, %127, %137 : vector<48x4xi1>, vector<48x4xf32>
      %c0_147 = arith.constant 0 : index
      %c0_148 = arith.constant 0 : index
      %141 = vector.load %arg10[%c0_147, %c0_148] : memref<48x4xf32, #tpu.memory_space<vmem>>, vector<48x4xf32>
      tpu.vector_store %arg10[%c0_147, %c0_148], %140 {strides = array<i32>} : memref<48x4xf32, #tpu.memory_space<vmem>>, vector<48x4xf32>,
    } else {
    }
    %c11 = arith.constant 11 : index
    %c0_15 = arith.constant 0 : index
    %18 = vector.load %arg10[%c11, %c0_15] : memref<48x4xf32, #tpu.memory_space<vmem>>, vector<24x4xf32>
    %c0_16 = arith.constant 0 : index
    %c0_17 = arith.constant 0 : index
    %c0_18 = arith.constant 0 : index
    %19 = vector.load %arg5[%c0_16, %c0_17, %c0_18] : memref<3x4x128xf32, #tpu.memory_space<vmem>>, vector<1x4x128xf32>
    %20 = vector.shape_cast %19 : vector<1x4x128xf32> to vector<4x128xf32>
    %cst = arith.constant dense<0.000000e+00> : vector<24x128xf32>
    %21 = tpu.matmul %18, %20, %cst {dimension_numbers = #tpu.dot_dimension_numbers<[1], [0], [0], [1], [0, 0, 1, 1], [], []>} : vector<24x4xf32>, vector<4x128xf32>, vector<24x128xf32> -> vector<24x128xf32>
    %c12 = arith.constant 12 : index
    %c0_19 = arith.constant 0 : index
    %22 = vector.load %arg10[%c12, %c0_19] : memref<48x4xf32, #tpu.memory_space<vmem>>, vector<24x4xf32>
    %c1 = arith.constant 1 : index
    %c0_20 = arith.constant 0 : index
    %c0_21 = arith.constant 0 : index
    %23 = vector.load %arg5[%c1, %c0_20, %c0_21] : memref<3x4x128xf32, #tpu.memory_space<vmem>>, vector<1x4x128xf32>
    %24 = vector.shape_cast %23 : vector<1x4x128xf32> to vector<4x128xf32>
    %cst_22 = arith.constant dense<0.000000e+00> : vector<24x128xf32>
    %25 = tpu.matmul %22, %24, %cst_22 {dimension_numbers = #tpu.dot_dimension_numbers<[1], [0], [0], [1], [0, 0, 1, 1], [], []>} : vector<24x4xf32>, vector<4x128xf32>, vector<24x128xf32> -> vector<24x128xf32>
    %26 = arith.addf %21, %25 : vector<24x128xf32>
    %c13 = arith.constant 13 : index
    %c0_23 = arith.constant 0 : index
    %27 = vector.load %arg10[%c13, %c0_23] : memref<48x4xf32, #tpu.memory_space<vmem>>, vector<24x4xf32>
    %c2 = arith.constant 2 : index
    %c0_24 = arith.constant 0 : index
    %c0_25 = arith.constant 0 : index
    %28 = vector.load %arg5[%c2, %c0_24, %c0_25] : memref<3x4x128xf32, #tpu.memory_space<vmem>>, vector<1x4x128xf32>
    %29 = vector.shape_cast %28 : vector<1x4x128xf32> to vector<4x128xf32>
    %cst_26 = arith.constant dense<0.000000e+00> : vector<24x128xf32>
    %30 = tpu.matmul %27, %29, %cst_26 {dimension_numbers = #tpu.dot_dimension_numbers<[1], [0], [0], [1], [0, 0, 1, 1], [], []>} : vector<24x4xf32>, vector<4x128xf32>, vector<24x128xf32> -> vector<24x128xf32>
    %31 = arith.addf %26, %30 : vector<24x128xf32>
    %c0_27 = arith.constant 0 : index
    %c0_28 = arith.constant 0 : index
    %c0_29 = arith.constant 0 : index
    %32 = vector.load %arg6[%c0_27, %c0_28, %c0_29] : memref<1x1x128xf32, #tpu.memory_space<vmem>>, vector<1x1x128xf32>
    %33 = vector.shape_cast %32 : vector<1x1x128xf32> to vector<1x128xf32>
    %34 = vector.broadcast %33 : vector<1x128xf32> to vector<24x128xf32>
    %35 = arith.addf %31, %34 : vector<24x128xf32>
    %c0_30 = arith.constant 0 : index
    %c0_31 = arith.constant 0 : index
    %36 = vector.load %arg11[%c0_30, %c0_31] : memref<24x128xf32, #tpu.memory_space<vmem>>, vector<24x128xf32>
    tpu.vector_store %arg11[%c0_30, %c0_31], %35 {strides = array<i32>} : memref<24x128xf32, #tpu.memory_space<vmem>>, vector<24x128xf32>,
    %37 = arith.extui %6 : i1 to i32
    %c0_i32_32 = arith.constant 0 : i32
    %38 = arith.cmpi ne, %37, %c0_i32_32 : i32
    scf.if %38 {
      %c0_141 = arith.constant 0 : index
      %c0_142 = arith.constant 0 : index
      %127 = vector.load %arg11[%c0_141, %c0_142] : memref<24x128xf32, #tpu.memory_space<vmem>>, vector<24x128xf32>
      %c4_i32 = arith.constant 4 : i32
      %128 = arith.subi %0, %c4_i32 : i32
      %129 = tpu.iota {dimensions = array<i32: 0>} : vector<24x1xi32>
      %130 = vector.broadcast %128 : i32 to vector<24x1xi32>
      %131 = arith.addi %130, %129 : vector<24x1xi32>
      %c0_i32_143 = arith.constant 0 : i32
      %132 = vector.broadcast %c0_i32_143 : i32 to vector<24x1xi32>
      %133 = arith.cmpi sge, %131, %132 : vector<24x1xi32>
      %c16_i32_144 = arith.constant 16 : i32
      %134 = vector.broadcast %c16_i32_144 : i32 to vector<24x1xi32>
      %135 = arith.cmpi slt, %131, %134 : vector<24x1xi32>
      %136 = arith.andi %133, %135 : vector<24x1xi1>
      %cst_145 = arith.constant 0.000000e+00 : f32
      %137 = vector.broadcast %cst_145 : f32 to vector<24x128xf32>
      %138 = vector.shape_cast %136 : vector<24x1xi1> to vector<24x1xi1>
      %139 = vector.broadcast %138 : vector<24x1xi1> to vector<24x128xi1>
      %140 = arith.select %139, %127, %137 : vector<24x128xi1>, vector<24x128xf32>
      %c0_146 = arith.constant 0 : index
      %c0_147 = arith.constant 0 : index
      %141 = vector.load %arg11[%c0_146, %c0_147] : memref<24x128xf32, #tpu.memory_space<vmem>>, vector<24x128xf32>
      tpu.vector_store %arg11[%c0_146, %c0_147], %140 {strides = array<i32>} : memref<24x128xf32, #tpu.memory_space<vmem>>, vector<24x128xf32>,
    } else {
    }
    %c0_33 = arith.constant 0 : index
    %c0_34 = arith.constant 0 : index
    %39 = vector.load %arg11[%c0_33, %c0_34] : memref<24x128xf32, #tpu.memory_space<vmem>>, vector<22x128xf32>
    %c0_35 = arith.constant 0 : index
    %c0_36 = arith.constant 0 : index
    %40 = vector.load %arg14[%c0_35, %c0_36] : memref<24x384xf32, #tpu.memory_space<vmem>>, vector<22x128xf32>
    tpu.vector_store %arg14[%c0_35, %c0_36], %39 {strides = array<i32>} : memref<24x384xf32, #tpu.memory_space<vmem>>, vector<22x128xf32>,
    %c1_37 = arith.constant 1 : index
    %c0_38 = arith.constant 0 : index
    %41 = vector.load %arg11[%c1_37, %c0_38] : memref<24x128xf32, #tpu.memory_space<vmem>>, vector<22x128xf32>
    %c0_39 = arith.constant 0 : index
    %c128 = arith.constant 128 : index
    %42 = vector.load %arg14[%c0_39, %c128] : memref<24x384xf32, #tpu.memory_space<vmem>>, vector<22x128xf32>
    tpu.vector_store %arg14[%c0_39, %c128], %41 {strides = array<i32>} : memref<24x384xf32, #tpu.memory_space<vmem>>, vector<22x128xf32>,
    %c2_40 = arith.constant 2 : index
    %c0_41 = arith.constant 0 : index
    %43 = vector.load %arg11[%c2_40, %c0_41] : memref<24x128xf32, #tpu.memory_space<vmem>>, vector<22x128xf32>
    %c0_42 = arith.constant 0 : index
    %c256 = arith.constant 256 : index
    %44 = vector.load %arg14[%c0_42, %c256] : memref<24x384xf32, #tpu.memory_space<vmem>>, vector<22x128xf32>
    tpu.vector_store %arg14[%c0_42, %c256], %43 {strides = array<i32>} : memref<24x384xf32, #tpu.memory_space<vmem>>, vector<22x128xf32>,
    %c0_43 = arith.constant 0 : index
    %c0_44 = arith.constant 0 : index
    %45 = vector.load %arg14[%c0_43, %c0_44] : memref<24x384xf32, #tpu.memory_space<vmem>>, vector<22x384xf32>
    %c0_45 = arith.constant 0 : index
    %c0_46 = arith.constant 0 : index
    %c0_47 = arith.constant 0 : index
    %46 = vector.load %arg7[%c0_45, %c0_46, %c0_47] : memref<4x384x128xf32, #tpu.memory_space<vmem>>, vector<1x384x128xf32>
    %47 = vector.shape_cast %46 : vector<1x384x128xf32> to vector<384x128xf32>
    %cst_48 = arith.constant dense<0.000000e+00> : vector<22x128xf32>
    %48 = tpu.matmul %45, %47, %cst_48 {dimension_numbers = #tpu.dot_dimension_numbers<[1], [0], [0], [1], [0, 0, 1, 1], [], []>} : vector<22x384xf32>, vector<384x128xf32>, vector<22x128xf32> -> vector<22x128xf32>
    %c0_49 = arith.constant 0 : index
    %c0_50 = arith.constant 0 : index
    %c0_51 = arith.constant 0 : index
    %49 = vector.load %arg8[%c0_49, %c0_50, %c0_51] : memref<4x1x128xf32, #tpu.memory_space<vmem>>, vector<1x1x128xf32>
    %50 = vector.shape_cast %49 : vector<1x1x128xf32> to vector<1x128xf32>
    %51 = vector.broadcast %50 : vector<1x128xf32> to vector<22x128xf32>
    %52 = arith.addf %48, %51 : vector<22x128xf32>
    %cst_52 = arith.constant 0.000000e+00 : f32
    %53 = vector.broadcast %cst_52 : f32 to vector<22x128xf32>
    %54 = arith.maximumf %52, %53 : vector<22x128xf32>
    %c0_53 = arith.constant 0 : index
    %c0_54 = arith.constant 0 : index
    %55 = vector.load %arg12[%c0_53, %c0_54] : memref<24x128xf32, #tpu.memory_space<vmem>>, vector<22x128xf32>
    tpu.vector_store %arg12[%c0_53, %c0_54], %54 {strides = array<i32>} : memref<24x128xf32, #tpu.memory_space<vmem>>, vector<22x128xf32>,
    %56 = arith.extui %6 : i1 to i32
    %c0_i32_55 = arith.constant 0 : i32
    %57 = arith.cmpi ne, %56, %c0_i32_55 : i32
    scf.if %57 {
      %c0_141 = arith.constant 0 : index
      %c0_142 = arith.constant 0 : index
      %127 = vector.load %arg12[%c0_141, %c0_142] : memref<24x128xf32, #tpu.memory_space<vmem>>, vector<22x128xf32>
      %c3_i32 = arith.constant 3 : i32
      %128 = arith.subi %0, %c3_i32 : i32
      %129 = tpu.iota {dimensions = array<i32: 0>} : vector<22x1xi32>
      %130 = vector.broadcast %128 : i32 to vector<22x1xi32>
      %131 = arith.addi %130, %129 : vector<22x1xi32>
      %c0_i32_143 = arith.constant 0 : i32
      %132 = vector.broadcast %c0_i32_143 : i32 to vector<22x1xi32>
      %133 = arith.cmpi sge, %131, %132 : vector<22x1xi32>
      %c16_i32_144 = arith.constant 16 : i32
      %134 = vector.broadcast %c16_i32_144 : i32 to vector<22x1xi32>
      %135 = arith.cmpi slt, %131, %134 : vector<22x1xi32>
      %136 = arith.andi %133, %135 : vector<22x1xi1>
      %cst_145 = arith.constant 0.000000e+00 : f32
      %137 = vector.broadcast %cst_145 : f32 to vector<22x128xf32>
      %138 = vector.shape_cast %136 : vector<22x1xi1> to vector<22x1xi1>
      %139 = vector.broadcast %138 : vector<22x1xi1> to vector<22x128xi1>
      %140 = arith.select %139, %127, %137 : vector<22x128xi1>, vector<22x128xf32>
      %c0_146 = arith.constant 0 : index
      %c0_147 = arith.constant 0 : index
      %141 = vector.load %arg12[%c0_146, %c0_147] : memref<24x128xf32, #tpu.memory_space<vmem>>, vector<22x128xf32>
      tpu.vector_store %arg12[%c0_146, %c0_147], %140 {strides = array<i32>} : memref<24x128xf32, #tpu.memory_space<vmem>>, vector<22x128xf32>,
    } else {
    }
    %c0_56 = arith.constant 0 : index
    %c0_57 = arith.constant 0 : index
    %58 = vector.load %arg12[%c0_56, %c0_57] : memref<24x128xf32, #tpu.memory_space<vmem>>, vector<20x128xf32>
    %c0_58 = arith.constant 0 : index
    %c0_59 = arith.constant 0 : index
    %59 = vector.load %arg14[%c0_58, %c0_59] : memref<24x384xf32, #tpu.memory_space<vmem>>, vector<20x128xf32>
    tpu.vector_store %arg14[%c0_58, %c0_59], %58 {strides = array<i32>} : memref<24x384xf32, #tpu.memory_space<vmem>>, vector<20x128xf32>,
    %c1_60 = arith.constant 1 : index
    %c0_61 = arith.constant 0 : index
    %60 = vector.load %arg12[%c1_60, %c0_61] : memref<24x128xf32, #tpu.memory_space<vmem>>, vector<20x128xf32>
    %c0_62 = arith.constant 0 : index
    %c128_63 = arith.constant 128 : index
    %61 = vector.load %arg14[%c0_62, %c128_63] : memref<24x384xf32, #tpu.memory_space<vmem>>, vector<20x128xf32>
    tpu.vector_store %arg14[%c0_62, %c128_63], %60 {strides = array<i32>} : memref<24x384xf32, #tpu.memory_space<vmem>>, vector<20x128xf32>,
    %c2_64 = arith.constant 2 : index
    %c0_65 = arith.constant 0 : index
    %62 = vector.load %arg12[%c2_64, %c0_65] : memref<24x128xf32, #tpu.memory_space<vmem>>, vector<20x128xf32>
    %c0_66 = arith.constant 0 : index
    %c256_67 = arith.constant 256 : index
    %63 = vector.load %arg14[%c0_66, %c256_67] : memref<24x384xf32, #tpu.memory_space<vmem>>, vector<20x128xf32>
    tpu.vector_store %arg14[%c0_66, %c256_67], %62 {strides = array<i32>} : memref<24x384xf32, #tpu.memory_space<vmem>>, vector<20x128xf32>,
    %c0_68 = arith.constant 0 : index
    %c0_69 = arith.constant 0 : index
    %64 = vector.load %arg14[%c0_68, %c0_69] : memref<24x384xf32, #tpu.memory_space<vmem>>, vector<20x384xf32>
    %c1_70 = arith.constant 1 : index
    %c0_71 = arith.constant 0 : index
    %c0_72 = arith.constant 0 : index
    %65 = vector.load %arg7[%c1_70, %c0_71, %c0_72] : memref<4x384x128xf32, #tpu.memory_space<vmem>>, vector<1x384x128xf32>
    %66 = vector.shape_cast %65 : vector<1x384x128xf32> to vector<384x128xf32>
    %cst_73 = arith.constant dense<0.000000e+00> : vector<20x128xf32>
    %67 = tpu.matmul %64, %66, %cst_73 {dimension_numbers = #tpu.dot_dimension_numbers<[1], [0], [0], [1], [0, 0, 1, 1], [], []>} : vector<20x384xf32>, vector<384x128xf32>, vector<20x128xf32> -> vector<20x128xf32>
    %c1_74 = arith.constant 1 : index
    %c0_75 = arith.constant 0 : index
    %c0_76 = arith.constant 0 : index
    %68 = vector.load %arg8[%c1_74, %c0_75, %c0_76] : memref<4x1x128xf32, #tpu.memory_space<vmem>>, vector<1x1x128xf32>
    %69 = vector.shape_cast %68 : vector<1x1x128xf32> to vector<1x128xf32>
    %70 = vector.broadcast %69 : vector<1x128xf32> to vector<20x128xf32>
    %71 = arith.addf %67, %70 : vector<20x128xf32>
    %cst_77 = arith.constant 0.000000e+00 : f32
    %72 = vector.broadcast %cst_77 : f32 to vector<20x128xf32>
    %73 = arith.maximumf %71, %72 : vector<20x128xf32>
    %c2_78 = arith.constant 2 : index
    %c0_79 = arith.constant 0 : index
    %74 = vector.load %arg11[%c2_78, %c0_79] : memref<24x128xf32, #tpu.memory_space<vmem>>, vector<20x128xf32>
    %cst_80 = arith.constant 1.000000e-01 : f32
    %75 = vector.broadcast %cst_80 : f32 to vector<20x128xf32>
    %76 = arith.mulf %75, %73 : vector<20x128xf32>
    %77 = arith.addf %74, %76 : vector<20x128xf32>
    %c0_81 = arith.constant 0 : index
    %c0_82 = arith.constant 0 : index
    %78 = vector.load %arg13[%c0_81, %c0_82] : memref<24x128xf32, #tpu.memory_space<vmem>>, vector<20x128xf32>
    tpu.vector_store %arg13[%c0_81, %c0_82], %77 {strides = array<i32>} : memref<24x128xf32, #tpu.memory_space<vmem>>, vector<20x128xf32>,
    %79 = arith.extui %6 : i1 to i32
    %c0_i32_83 = arith.constant 0 : i32
    %80 = arith.cmpi ne, %79, %c0_i32_83 : i32
    scf.if %80 {
      %c0_141 = arith.constant 0 : index
      %c0_142 = arith.constant 0 : index
      %127 = vector.load %arg13[%c0_141, %c0_142] : memref<24x128xf32, #tpu.memory_space<vmem>>, vector<20x128xf32>
      %c2_i32 = arith.constant 2 : i32
      %128 = arith.subi %0, %c2_i32 : i32
      %129 = tpu.iota {dimensions = array<i32: 0>} : vector<20x1xi32>
      %130 = vector.broadcast %128 : i32 to vector<20x1xi32>
      %131 = arith.addi %130, %129 : vector<20x1xi32>
      %c0_i32_143 = arith.constant 0 : i32
      %132 = vector.broadcast %c0_i32_143 : i32 to vector<20x1xi32>
      %133 = arith.cmpi sge, %131, %132 : vector<20x1xi32>
      %c16_i32_144 = arith.constant 16 : i32
      %134 = vector.broadcast %c16_i32_144 : i32 to vector<20x1xi32>
      %135 = arith.cmpi slt, %131, %134 : vector<20x1xi32>
      %136 = arith.andi %133, %135 : vector<20x1xi1>
      %cst_145 = arith.constant 0.000000e+00 : f32
      %137 = vector.broadcast %cst_145 : f32 to vector<20x128xf32>
      %138 = vector.shape_cast %136 : vector<20x1xi1> to vector<20x1xi1>
      %139 = vector.broadcast %138 : vector<20x1xi1> to vector<20x128xi1>
      %140 = arith.select %139, %127, %137 : vector<20x128xi1>, vector<20x128xf32>
      %c0_146 = arith.constant 0 : index
      %c0_147 = arith.constant 0 : index
      %141 = vector.load %arg13[%c0_146, %c0_147] : memref<24x128xf32, #tpu.memory_space<vmem>>, vector<20x128xf32>
      tpu.vector_store %arg13[%c0_146, %c0_147], %140 {strides = array<i32>} : memref<24x128xf32, #tpu.memory_space<vmem>>, vector<20x128xf32>,
    } else {
    }
    %c0_84 = arith.constant 0 : index
    %c0_85 = arith.constant 0 : index
    %81 = vector.load %arg13[%c0_84, %c0_85] : memref<24x128xf32, #tpu.memory_space<vmem>>, vector<18x128xf32>
    %c0_86 = arith.constant 0 : index
    %c0_87 = arith.constant 0 : index
    %82 = vector.load %arg14[%c0_86, %c0_87] : memref<24x384xf32, #tpu.memory_space<vmem>>, vector<18x128xf32>
    tpu.vector_store %arg14[%c0_86, %c0_87], %81 {strides = array<i32>} : memref<24x384xf32, #tpu.memory_space<vmem>>, vector<18x128xf32>,
    %c1_88 = arith.constant 1 : index
    %c0_89 = arith.constant 0 : index
    %83 = vector.load %arg13[%c1_88, %c0_89] : memref<24x128xf32, #tpu.memory_space<vmem>>, vector<18x128xf32>
    %c0_90 = arith.constant 0 : index
    %c128_91 = arith.constant 128 : index
    %84 = vector.load %arg14[%c0_90, %c128_91] : memref<24x384xf32, #tpu.memory_space<vmem>>, vector<18x128xf32>
    tpu.vector_store %arg14[%c0_90, %c128_91], %83 {strides = array<i32>} : memref<24x384xf32, #tpu.memory_space<vmem>>, vector<18x128xf32>,
    %c2_92 = arith.constant 2 : index
    %c0_93 = arith.constant 0 : index
    %85 = vector.load %arg13[%c2_92, %c0_93] : memref<24x128xf32, #tpu.memory_space<vmem>>, vector<18x128xf32>
    %c0_94 = arith.constant 0 : index
    %c256_95 = arith.constant 256 : index
    %86 = vector.load %arg14[%c0_94, %c256_95] : memref<24x384xf32, #tpu.memory_space<vmem>>, vector<18x128xf32>
    tpu.vector_store %arg14[%c0_94, %c256_95], %85 {strides = array<i32>} : memref<24x384xf32, #tpu.memory_space<vmem>>, vector<18x128xf32>,
    %c0_96 = arith.constant 0 : index
    %c0_97 = arith.constant 0 : index
    %87 = vector.load %arg14[%c0_96, %c0_97] : memref<24x384xf32, #tpu.memory_space<vmem>>, vector<18x384xf32>
    %c2_98 = arith.constant 2 : index
    %c0_99 = arith.constant 0 : index
    %c0_100 = arith.constant 0 : index
    %88 = vector.load %arg7[%c2_98, %c0_99, %c0_100] : memref<4x384x128xf32, #tpu.memory_space<vmem>>, vector<1x384x128xf32>
    %89 = vector.shape_cast %88 : vector<1x384x128xf32> to vector<384x128xf32>
    %cst_101 = arith.constant dense<0.000000e+00> : vector<18x128xf32>
    %90 = tpu.matmul %87, %89, %cst_101 {dimension_numbers = #tpu.dot_dimension_numbers<[1], [0], [0], [1], [0, 0, 1, 1], [], []>} : vector<18x384xf32>, vector<384x128xf32>, vector<18x128xf32> -> vector<18x128xf32>
    %c2_102 = arith.constant 2 : index
    %c0_103 = arith.constant 0 : index
    %c0_104 = arith.constant 0 : index
    %91 = vector.load %arg8[%c2_102, %c0_103, %c0_104] : memref<4x1x128xf32, #tpu.memory_space<vmem>>, vector<1x1x128xf32>
    %92 = vector.shape_cast %91 : vector<1x1x128xf32> to vector<1x128xf32>
    %93 = vector.broadcast %92 : vector<1x128xf32> to vector<18x128xf32>
    %94 = arith.addf %90, %93 : vector<18x128xf32>
    %cst_105 = arith.constant 0.000000e+00 : f32
    %95 = vector.broadcast %cst_105 : f32 to vector<18x128xf32>
    %96 = arith.maximumf %94, %95 : vector<18x128xf32>
    %c0_106 = arith.constant 0 : index
    %c0_107 = arith.constant 0 : index
    %97 = vector.load %arg11[%c0_106, %c0_107] : memref<24x128xf32, #tpu.memory_space<vmem>>, vector<18x128xf32>
    tpu.vector_store %arg11[%c0_106, %c0_107], %96 {strides = array<i32>} : memref<24x128xf32, #tpu.memory_space<vmem>>, vector<18x128xf32>,
    %98 = arith.extui %6 : i1 to i32
    %c0_i32_108 = arith.constant 0 : i32
    %99 = arith.cmpi ne, %98, %c0_i32_108 : i32
    scf.if %99 {
      %c0_141 = arith.constant 0 : index
      %c0_142 = arith.constant 0 : index
      %127 = vector.load %arg11[%c0_141, %c0_142] : memref<24x128xf32, #tpu.memory_space<vmem>>, vector<18x128xf32>
      %c1_i32_143 = arith.constant 1 : i32
      %128 = arith.subi %0, %c1_i32_143 : i32
      %129 = tpu.iota {dimensions = array<i32: 0>} : vector<18x1xi32>
      %130 = vector.broadcast %128 : i32 to vector<18x1xi32>
      %131 = arith.addi %130, %129 : vector<18x1xi32>
      %c0_i32_144 = arith.constant 0 : i32
      %132 = vector.broadcast %c0_i32_144 : i32 to vector<18x1xi32>
      %133 = arith.cmpi sge, %131, %132 : vector<18x1xi32>
      %c16_i32_145 = arith.constant 16 : i32
      %134 = vector.broadcast %c16_i32_145 : i32 to vector<18x1xi32>
      %135 = arith.cmpi slt, %131, %134 : vector<18x1xi32>
      %136 = arith.andi %133, %135 : vector<18x1xi1>
      %cst_146 = arith.constant 0.000000e+00 : f32
      %137 = vector.broadcast %cst_146 : f32 to vector<18x128xf32>
      %138 = vector.shape_cast %136 : vector<18x1xi1> to vector<18x1xi1>
      %139 = vector.broadcast %138 : vector<18x1xi1> to vector<18x128xi1>
      %140 = arith.select %139, %127, %137 : vector<18x128xi1>, vector<18x128xf32>
      %c0_147 = arith.constant 0 : index
      %c0_148 = arith.constant 0 : index
      %141 = vector.load %arg11[%c0_147, %c0_148] : memref<24x128xf32, #tpu.memory_space<vmem>>, vector<18x128xf32>
      tpu.vector_store %arg11[%c0_147, %c0_148], %140 {strides = array<i32>} : memref<24x128xf32, #tpu.memory_space<vmem>>, vector<18x128xf32>,
    } else {
    }
    %c0_109 = arith.constant 0 : index
    %c0_110 = arith.constant 0 : index
    %100 = vector.load %arg11[%c0_109, %c0_110] : memref<24x128xf32, #tpu.memory_space<vmem>>, vector<16x128xf32>
    %c0_111 = arith.constant 0 : index
    %c0_112 = arith.constant 0 : index
    %101 = vector.load %arg14[%c0_111, %c0_112] : memref<24x384xf32, #tpu.memory_space<vmem>>, vector<16x128xf32>
    tpu.vector_store %arg14[%c0_111, %c0_112], %100 {strides = array<i32>} : memref<24x384xf32, #tpu.memory_space<vmem>>, vector<16x128xf32>,
    %c1_113 = arith.constant 1 : index
    %c0_114 = arith.constant 0 : index
    %102 = vector.load %arg11[%c1_113, %c0_114] : memref<24x128xf32, #tpu.memory_space<vmem>>, vector<16x128xf32>
    %c0_115 = arith.constant 0 : index
    %c128_116 = arith.constant 128 : index
    %103 = vector.load %arg14[%c0_115, %c128_116] : memref<24x384xf32, #tpu.memory_space<vmem>>, vector<16x128xf32>
    tpu.vector_store %arg14[%c0_115, %c128_116], %102 {strides = array<i32>} : memref<24x384xf32, #tpu.memory_space<vmem>>, vector<16x128xf32>,
    %c2_117 = arith.constant 2 : index
    %c0_118 = arith.constant 0 : index
    %104 = vector.load %arg11[%c2_117, %c0_118] : memref<24x128xf32, #tpu.memory_space<vmem>>, vector<16x128xf32>
    %c0_119 = arith.constant 0 : index
    %c256_120 = arith.constant 256 : index
    %105 = vector.load %arg14[%c0_119, %c256_120] : memref<24x384xf32, #tpu.memory_space<vmem>>, vector<16x128xf32>
    tpu.vector_store %arg14[%c0_119, %c256_120], %104 {strides = array<i32>} : memref<24x384xf32, #tpu.memory_space<vmem>>, vector<16x128xf32>,
    %c0_121 = arith.constant 0 : index
    %c0_122 = arith.constant 0 : index
    %106 = vector.load %arg14[%c0_121, %c0_122] : memref<24x384xf32, #tpu.memory_space<vmem>>, vector<16x384xf32>
    %c3 = arith.constant 3 : index
    %c0_123 = arith.constant 0 : index
    %c0_124 = arith.constant 0 : index
    %107 = vector.load %arg7[%c3, %c0_123, %c0_124] : memref<4x384x128xf32, #tpu.memory_space<vmem>>, vector<1x384x128xf32>
    %108 = vector.shape_cast %107 : vector<1x384x128xf32> to vector<384x128xf32>
    %cst_125 = arith.constant dense<0.000000e+00> : vector<16x128xf32>
    %109 = tpu.matmul %106, %108, %cst_125 {dimension_numbers = #tpu.dot_dimension_numbers<[1], [0], [0], [1], [0, 0, 1, 1], [], []>} : vector<16x384xf32>, vector<384x128xf32>, vector<16x128xf32> -> vector<16x128xf32>
    %c3_126 = arith.constant 3 : index
    %c0_127 = arith.constant 0 : index
    %c0_128 = arith.constant 0 : index
    %110 = vector.load %arg8[%c3_126, %c0_127, %c0_128] : memref<4x1x128xf32, #tpu.memory_space<vmem>>, vector<1x1x128xf32>
    %111 = vector.shape_cast %110 : vector<1x1x128xf32> to vector<1x128xf32>
    %112 = vector.broadcast %111 : vector<1x128xf32> to vector<16x128xf32>
    %113 = arith.addf %109, %112 : vector<16x128xf32>
    %cst_129 = arith.constant 0.000000e+00 : f32
    %114 = vector.broadcast %cst_129 : f32 to vector<16x128xf32>
    %115 = arith.maximumf %113, %114 : vector<16x128xf32>
    %c2_130 = arith.constant 2 : index
    %c0_131 = arith.constant 0 : index
    %116 = vector.load %arg13[%c2_130, %c0_131] : memref<24x128xf32, #tpu.memory_space<vmem>>, vector<16x128xf32>
    %cst_132 = arith.constant 1.000000e-01 : f32
    %117 = vector.broadcast %cst_132 : f32 to vector<16x128xf32>
    %118 = arith.mulf %117, %115 : vector<16x128xf32>
    %119 = arith.addf %116, %118 : vector<16x128xf32>
    %c0_133 = arith.constant 0 : index
    %c0_134 = arith.constant 0 : index
    %120 = vector.load %arg12[%c0_133, %c0_134] : memref<24x128xf32, #tpu.memory_space<vmem>>, vector<16x128xf32>
    tpu.vector_store %arg12[%c0_133, %c0_134], %119 {strides = array<i32>} : memref<24x128xf32, #tpu.memory_space<vmem>>, vector<16x128xf32>,
    %121 = arith.extui %6 : i1 to i32
    %c0_i32_135 = arith.constant 0 : i32
    %122 = arith.cmpi ne, %121, %c0_i32_135 : i32
    scf.if %122 {
      %c0_141 = arith.constant 0 : index
      %c0_142 = arith.constant 0 : index
      %127 = vector.load %arg12[%c0_141, %c0_142] : memref<24x128xf32, #tpu.memory_space<vmem>>, vector<16x128xf32>
      %c0_i32_143 = arith.constant 0 : i32
      %128 = arith.subi %0, %c0_i32_143 : i32
      %129 = tpu.iota {dimensions = array<i32: 0>} : vector<16x1xi32>
      %130 = vector.broadcast %128 : i32 to vector<16x1xi32>
      %131 = arith.addi %130, %129 : vector<16x1xi32>
      %c0_i32_144 = arith.constant 0 : i32
      %132 = vector.broadcast %c0_i32_144 : i32 to vector<16x1xi32>
      %133 = arith.cmpi sge, %131, %132 : vector<16x1xi32>
      %c16_i32_145 = arith.constant 16 : i32
      %134 = vector.broadcast %c16_i32_145 : i32 to vector<16x1xi32>
      %135 = arith.cmpi slt, %131, %134 : vector<16x1xi32>
      %136 = arith.andi %133, %135 : vector<16x1xi1>
      %cst_146 = arith.constant 0.000000e+00 : f32
      %137 = vector.broadcast %cst_146 : f32 to vector<16x128xf32>
      %138 = vector.shape_cast %136 : vector<16x1xi1> to vector<16x1xi1>
      %139 = vector.broadcast %138 : vector<16x1xi1> to vector<16x128xi1>
      %140 = arith.select %139, %127, %137 : vector<16x128xi1>, vector<16x128xf32>
      %c0_147 = arith.constant 0 : index
      %c0_148 = arith.constant 0 : index
      %141 = vector.load %arg12[%c0_147, %c0_148] : memref<24x128xf32, #tpu.memory_space<vmem>>, vector<16x128xf32>
      tpu.vector_store %arg12[%c0_147, %c0_148], %140 {strides = array<i32>} : memref<24x128xf32, #tpu.memory_space<vmem>>, vector<16x128xf32>,
    } else {
    }
    %c0_136 = arith.constant 0 : index
    %c0_137 = arith.constant 0 : index
    %123 = vector.load %arg12[%c0_136, %c0_137] : memref<24x128xf32, #tpu.memory_space<vmem>>, vector<16x128xf32>
    %c0_138 = arith.constant 0 : index
    %c0_139 = arith.constant 0 : index
    %c0_140 = arith.constant 0 : index
    %124 = vector.load %arg9[%c0_138, %c0_139, %c0_140] : memref<1x16x128xf32, #tpu.memory_space<vmem>>, vector<1x16x128xf32>
    %125 = vector.shape_cast %124 : vector<1x16x128xf32> to vector<16x128xf32>
    %126 = vector.shape_cast %123 : vector<16x128xf32> to vector<1x16x128xf32>
    tpu.vector_store %arg9[%c0_138, %c0_139, %c0_140], %126 {strides = array<i32>} : memref<1x16x128xf32, #tpu.memory_space<vmem>>, vector<1x16x128xf32>,
    return
  }
  func.func @transform_0(%arg0: i32, %arg1: i32) -> (i32, i32, i32) {
    %c1_i32 = arith.constant 1 : i32
    %0 = arith.muli %arg1, %c1_i32 : i32
    %c1_i32_0 = arith.constant 1 : i32
    %1 = arith.subi %0, %c1_i32_0 : i32
    %c0_i32 = arith.constant 0 : i32
    %2 = arith.maxsi %1, %c0_i32 : i32
    %c0_i32_1 = arith.constant 0 : i32
    %c0_i32_2 = arith.constant 0 : i32
    return %arg0, %2, %c0_i32_1 : i32, i32, i32
  }
  func.func @transform_1(%arg0: i32, %arg1: i32) -> (i32, i32, i32) {
    %c0_i32 = arith.constant 0 : i32
    %c0_i32_0 = arith.constant 0 : i32
    return %arg0, %arg1, %c0_i32 : i32, i32, i32
  }
  func.func @transform_2(%arg0: i32, %arg1: i32) -> (i32, i32, i32) {
    %c1_i32 = arith.constant 1 : i32
    %0 = arith.muli %arg1, %c1_i32 : i32
    %c1_i32_0 = arith.constant 1 : i32
    %1 = arith.addi %0, %c1_i32_0 : i32
    %c0_i32 = arith.constant 0 : i32
    %2 = arith.minsi %1, %c0_i32 : i32
    %c0_i32_1 = arith.constant 0 : i32
    %c0_i32_2 = arith.constant 0 : i32
    return %arg0, %2, %c0_i32_1 : i32, i32, i32
  }
  func.func @transform_3(%arg0: i32, %arg1: i32) -> (i32, i32, i32) {
    %c0_i32 = arith.constant 0 : i32
    %c0_i32_0 = arith.constant 0 : i32
    %c0_i32_1 = arith.constant 0 : i32
    %c0_i32_2 = arith.constant 0 : i32
    return %c0_i32, %c0_i32_0, %c0_i32_1 : i32, i32, i32
  }
  func.func @transform_4(%arg0: i32, %arg1: i32) -> (i32, i32, i32) {
    %c0_i32 = arith.constant 0 : i32
    %c0_i32_0 = arith.constant 0 : i32
    %c0_i32_1 = arith.constant 0 : i32
    %c0_i32_2 = arith.constant 0 : i32
    return %c0_i32, %c0_i32_0, %c0_i32_1 : i32, i32, i32
  }
  func.func @transform_5(%arg0: i32, %arg1: i32) -> (i32, i32, i32) {
    %c0_i32 = arith.constant 0 : i32
    %c0_i32_0 = arith.constant 0 : i32
    %c0_i32_1 = arith.constant 0 : i32
    %c0_i32_2 = arith.constant 0 : i32
    return %c0_i32, %c0_i32_0, %c0_i32_1 : i32, i32, i32
  }
  func.func @transform_6(%arg0: i32, %arg1: i32) -> (i32, i32, i32) {
    %c0_i32 = arith.constant 0 : i32
    %c0_i32_0 = arith.constant 0 : i32
    %c0_i32_1 = arith.constant 0 : i32
    %c0_i32_2 = arith.constant 0 : i32
    return %c0_i32, %c0_i32_0, %c0_i32_1 : i32, i32, i32
  }
  func.func @transform_7(%arg0: i32, %arg1: i32) -> (i32, i32, i32) {
    %c0_i32 = arith.constant 0 : i32
    %c0_i32_0 = arith.constant 0 : i32
    return %arg0, %arg1, %c0_i32 : i32, i32, i32
  }
}

</mosaic_0001>

<llo_original>
// kernel: tpu_custom_call.1
$region0: #{tpu_custom_call.1}
  #allocation0 [shape = 'u32[]', space=smem, size = 0x4, offset = 0x4, fixed_abs, tag = 'smem constant byte address 0x4 - core index']
  #allocation1 [shape = 'u32[144,128]{1,0:T(1,128)}', space=vmem, size = 0x12000, scoped, tag = 'internal scratch']
  #allocation2 [shape = 'f32[48,4]{1,0:T(8,128)}', space=vmem, size = 0x6000, scoped, tag = 'scratch operand']
  #allocation3 [shape = 'f32[24,128]{1,0:T(8,128)}', space=vmem, size = 0x3000, scoped, tag = 'scratch operand']
  #allocation4 [shape = 'f32[24,128]{1,0:T(8,128)}', space=vmem, size = 0x3000, scoped, tag = 'scratch operand']
  #allocation5 [shape = 'f32[24,128]{1,0:T(8,128)}', space=vmem, size = 0x3000, scoped, tag = 'scratch operand']
  #allocation6 [shape = 'f32[24,384]{1,0:T(8,128)}', space=vmem, size = 0x9000, scoped, tag = 'scratch operand']
  %s0 = inlined_call_operand.vmem [shape: f32[2,16,4], index: 0, kind: input, shape index: {}]
  %s1 = inlined_call_operand.vmem [shape: f32[2,16,4], index: 1, kind: input, shape index: {}]
  %s2 = inlined_call_operand.vmem [shape: f32[2,16,4], index: 2, kind: input, shape index: {}]
  %s3 = inlined_call_operand.vmem [shape: f32[3,4,128], index: 3, kind: input, shape index: {}]
  %s4 = inlined_call_operand.vmem [shape: f32[1,1,128], index: 4, kind: input, shape index: {}]
  %s5 = inlined_call_operand.hbm [shape: f32[4,384,128], index: 5, kind: input, shape index: {}]
  %s6 = inlined_call_operand.vmem [shape: f32[4,1,128], index: 6, kind: input, shape index: {}]
  %s7 = inlined_call_operand.hbm [shape: f32[2,16,128], index: 7, kind: output, shape index: {}]
  %s8 = sld [smem:[#allocation0]]
  $region89: #{tpu_custom_call.1} parent=0
    _
  %s10 = ssub.s32 1, %s8
  %s11 = scalar_select 0, %s10, %s8
  $region1: #{tpu_custom_call.1} parent=0
    #allocation7 [shape = 'u8[786432]{0}', space=vmem, size = 0xc0000, scoped, tag = 'input window, operand 5, single buffered']
    #allocation8 [shape = 's32[2]{0}', space=sflag, size = 0x8, scoped, tag = 'scoped memory for tpu_custom_call.1']
    #allocation9 [shape = 's32[2]{0}', space=sflag, size = 0x8, scoped, tag = 'scoped memory for tpu_custom_call.1']
    #allocation10 [shape = 'u8[16384]{0}', space=vmem, size = 0x4000, scoped, tag = 'output window, operand 0']
    %12 = vsyncpa [#allocation8], 0
    %13 = vsyncpa [#allocation9], 0
    %s14 = scalar_lea.sflag [#allocation9], 1
    %15 = vsyncpa %s14, 0
    loop: start=0, step=1, limit=4
    $region2: #{tpu_custom_call.1} parent=1 // loop_pre_header
      _
    $region3: #{tpu_custom_call.1} parent=1 // loop_header
      %s17 = sphi 0, %s21
      %p18 = scmp.ge.s32.totalorder %s17, 4
      %s24 = sphi 0, %s36
      %s25 = sphi 0, %s32
      %s26 = sphi 0, %s24
      %s27 = sphi 0, %s25
      %s28 = sphi 0, %s26
      %s29 = sphi 0, %s27
      %s47 = sphi 0, %s49
      %s50 = sphi 0, %s47
      %s51 = sphi 0, %s50
      %s67 = sphi 0, %s51
      %s75 = sphi 0, %s77
      %s78 = sphi 0, %s75
      %s79 = sphi 0, %s78
      %s95 = sphi 0, %s79
      %s109 = sphi 0, %s111
      %s112 = sphi 0, %s109
      %s113 = sphi 0, %s112
      %s129 = sphi 0, %s113
      %s133 = sphi 0, %s133
      %s135 = sphi 0, %s133
      %s136 = sphi 0, %s135
      %s150 = sphi 0, %s136
      %s154 = sphi 0, %s154
      %s156 = sphi 0, %s154
      %s157 = sphi 0, %s156
      %s171 = sphi 0, %s157
      %s175 = sphi 0, %s175
      %s177 = sphi 0, %s175
      %s178 = sphi 0, %s177
      %s192 = sphi 0, %s178
      %s196 = sphi 0, %s196
      %s198 = sphi 0, %s196
      %s199 = sphi 0, %s198
      %s213 = sphi 0, %s199
      %s221 = sphi 0, %s223
      %s224 = sphi 0, %s221
      %s225 = sphi 0, %s224
      %s241 = sphi 0, %s225
    $region4: #{tpu_custom_call.1} parent=1 // loop_header_branch
      %20 = sbr.rel (%p18) target = $region8
    $region5: #{tpu_custom_call.1} parent=1 // loop_body
      %s22 = ssub.s32 %s17, 1
      %s23 = ssub.s32 %s17, 2
      %s30 = sadd.s32 1, %s25
      %p31 = scmp.ge.s32.totalorder %s30, 1
      %s32 = scalar_select %p31, 0, %s30
      %s33 = sadd.s32 1, %s24
      %s34 = scalar_select %p31, %s33, %s24
      %p35 = scmp.ge.s32.totalorder %s34, 2
      %s36 = scalar_select %p35, 0, %s34
      %s37 = ssub.s32 %s25, 1
      %p38 = scmp.gt.s32.totalorder %s37, 0
      %s39 = scalar_select %p38, %s37, 0
      %s40 = ssub.s32 %s32, 1
      %p41 = scmp.gt.s32.totalorder %s40, 0
      %s42 = scalar_select %p41, %s40, 0
      %s43 = ssub.s32 %s24, %s36
      %s44 = ssub.s32 %s39, %s42
      %s45 = sor.u32 %s43, %s44
      %p46 = scmp.eq.s32.totalorder %s45, 0
      %s48 = sadd.s32 %s47, 1
      %s49 = scalar_select %p46, %s47, %s48
      %p52 = pneg %p46
      %p53 = scmp.eq.s32.totalorder %s17, 1
      %p54 = por %p52, %p53
      %p55 = scmp.ne.s32.totalorder %s47, %s50
      %p56 = scmp.eq.s32.totalorder %s17, 0
      %p57 = por %p55, %p56
      %p58 = scmp.ne.s32.totalorder %s47, %s50
      %p59 = scmp.eq.s32.totalorder %s22, 1
      %p60 = por %p58, %p59
      %p61 = scmp.ne.s32.totalorder %s50, %s51
      %p62 = scmp.eq.s32.totalorder %s22, 0
      %p63 = por %p61, %p62
      %p64 = scmp.ne.s32.totalorder %s50, %s51
      %p65 = scmp.eq.s32.totalorder %s23, 1
      %p66 = por %p64, %p65
      %p68 = scmp.ne.s32.totalorder %s51, %s67
      %p69 = scmp.eq.s32.totalorder %s23, 0
      %p70 = por %p68, %p69
      %s71 = ssub.s32 %s24, %s36
      %s72 = ssub.s32 %s25, %s32
      %s73 = sor.u32 %s71, %s72
      %p74 = scmp.eq.s32.totalorder %s73, 0
      %s76 = sadd.s32 %s75, 1
      %s77 = scalar_select %p74, %s75, %s76
      %p80 = pneg %p74
      %p81 = scmp.eq.s32.totalorder %s17, 1
      %p82 = por %p80, %p81
      %p83 = scmp.ne.s32.totalorder %s75, %s78
      %p84 = scmp.eq.s32.totalorder %s17, 0
      %p85 = por %p83, %p84
      %p86 = scmp.ne.s32.totalorder %s75, %s78
      %p87 = scmp.eq.s32.totalorder %s22, 1
      %p88 = por %p86, %p87
      %p89 = scmp.ne.s32.totalorder %s78, %s79
      %p90 = scmp.eq.s32.totalorder %s22, 0
      %p91 = por %p89, %p90
      %p92 = scmp.ne.s32.totalorder %s78, %s79
      %p93 = scmp.eq.s32.totalorder %s23, 1
      %p94 = por %p92, %p93
      %p96 = scmp.ne.s32.totalorder %s79, %s95
      %p97 = scmp.eq.s32.totalorder %s23, 0
      %p98 = por %p96, %p97
      %s99 = sadd.s32 %s25, 1
      %p100 = scmp.lt.s32.totalorder %s99, 0
      %s101 = scalar_select %p100, %s99, 0
      %s102 = sadd.s32 %s32, 1
      %p103 = scmp.lt.s32.totalorder %s102, 0
      %s104 = scalar_select %p103, %s102, 0
      %s105 = ssub.s32 %s24, %s36
      %s106 = ssub.s32 %s101, %s104
      %s107 = sor.u32 %s105, %s106
      %p108 = scmp.eq.s32.totalorder %s107, 0
      %s110 = sadd.s32 %s109, 1
      %s111 = scalar_select %p108, %s109, %s110
      %p114 = pneg %p108
      %p115 = scmp.eq.s32.totalorder %s17, 1
      %p116 = por %p114, %p115
      %p117 = scmp.ne.s32.totalorder %s109, %s112
      %p118 = scmp.eq.s32.totalorder %s17, 0
      %p119 = por %p117, %p118
      %p120 = scmp.ne.s32.totalorder %s109, %s112
      %p121 = scmp.eq.s32.totalorder %s22, 1
      %p122 = por %p120, %p121
      %p123 = scmp.ne.s32.totalorder %s112, %s113
      %p124 = scmp.eq.s32.totalorder %s22, 0
      %p125 = por %p123, %p124
      %p126 = scmp.ne.s32.totalorder %s112, %s113
      %p127 = scmp.eq.s32.totalorder %s23, 1
      %p128 = por %p126, %p127
      %p130 = scmp.ne.s32.totalorder %s113, %s129
      %p131 = scmp.eq.s32.totalorder %s23, 0
      %p132 = por %p130, %p131
      %s134 = sadd.s32 %s133, 1
      %p137 = scmp.eq.s32.totalorder %s17, 1
      %p138 = scmp.ne.s32.totalorder %s133, %s135
      %p139 = scmp.eq.s32.totalorder %s17, 0
      %p140 = por %p138, %p139
      %p141 = scmp.ne.s32.totalorder %s133, %s135
      %p142 = scmp.eq.s32.totalorder %s22, 1
      %p143 = por %p141, %p142
      %p144 = scmp.ne.s32.totalorder %s135, %s136
      %p145 = scmp.eq.s32.totalorder %s22, 0
      %p146 = por %p144, %p145
      %p147 = scmp.ne.s32.totalorder %s135, %s136
      %p148 = scmp.eq.s32.totalorder %s23, 1
      %p149 = por %p147, %p148
      %p151 = scmp.ne.s32.totalorder %s136, %s150
      %p152 = scmp.eq.s32.totalorder %s23, 0
      %p153 = por %p151, %p152
      %s155 = sadd.s32 %s154, 1
      %p158 = scmp.eq.s32.totalorder %s17, 1
      %p159 = scmp.ne.s32.totalorder %s154, %s156
      %p160 = scmp.eq.s32.totalorder %s17, 0
      %p161 = por %p159, %p160
      %p162 = scmp.ne.s32.totalorder %s154, %s156
      %p163 = scmp.eq.s32.totalorder %s22, 1
      %p164 = por %p162, %p163
      %p165 = scmp.ne.s32.totalorder %s156, %s157
      %p166 = scmp.eq.s32.totalorder %s22, 0
      %p167 = por %p165, %p166
      %p168 = scmp.ne.s32.totalorder %s156, %s157
      %p169 = scmp.eq.s32.totalorder %s23, 1
      %p170 = por %p168, %p169
      %p172 = scmp.ne.s32.totalorder %s157, %s171
      %p173 = scmp.eq.s32.totalorder %s23, 0
      %p174 = por %p172, %p173
      %s176 = sadd.s32 %s175, 1
      %p179 = scmp.eq.s32.totalorder %s17, 1
      %p180 = scmp.ne.s32.totalorder %s175, %s177
      %p181 = scmp.eq.s32.totalorder %s17, 0
      %p182 = por %p180, %p181
      %p183 = scmp.ne.s32.totalorder %s175, %s177
      %p184 = scmp.eq.s32.totalorder %s22, 1
      %p185 = por %p183, %p184
      %p186 = scmp.ne.s32.totalorder %s177, %s178
      %p187 = scmp.eq.s32.totalorder %s22, 0
      %p188 = por %p186, %p187
      %p189 = scmp.ne.s32.totalorder %s177, %s178
      %p190 = scmp.eq.s32.totalorder %s23, 1
      %p191 = por %p189, %p190
      %p193 = scmp.ne.s32.totalorder %s178, %s192
      %p194 = scmp.eq.s32.totalorder %s23, 0
      %p195 = por %p193, %p194
      %s197 = sadd.s32 %s196, 1
      %p200 = scmp.eq.s32.totalorder %s17, 1
      %p201 = scmp.ne.s32.totalorder %s196, %s198
      %p202 = scmp.eq.s32.totalorder %s17, 0
      %p203 = por %p201, %p202
      %p204 = scmp.ne.s32.totalorder %s196, %s198
      %p205 = scmp.eq.s32.totalorder %s22, 1
      %p206 = por %p204, %p205
      %p207 = scmp.ne.s32.totalorder %s198, %s199
      %p208 = scmp.eq.s32.totalorder %s22, 0
      %p209 = por %p207, %p208
      %p210 = scmp.ne.s32.totalorder %s198, %s199
      %p211 = scmp.eq.s32.totalorder %s23, 1
      %p212 = por %p210, %p211
      %p214 = scmp.ne.s32.totalorder %s199, %s213
      %p215 = scmp.eq.s32.totalorder %s23, 0
      %p216 = por %p214, %p215
      %s217 = ssub.s32 %s24, %s36
      %s218 = ssub.s32 %s25, %s32
      %s219 = sor.u32 %s217, %s218
      %p220 = scmp.eq.s32.totalorder %s219, 0
      %s222 = sadd.s32 %s221, 1
      %s223 = scalar_select %p220, %s221, %s222
      %p226 = pneg %p220
      %p227 = scmp.eq.s32.totalorder %s17, 1
      %p228 = por %p226, %p227
      %p229 = scmp.ne.s32.totalorder %s221, %s224
      %p230 = scmp.eq.s32.totalorder %s17, 0
      %p231 = por %p229, %p230
      %p232 = scmp.ne.s32.totalorder %s221, %s224
      %p233 = scmp.eq.s32.totalorder %s22, 1
      %p234 = por %p232, %p233
      %p235 = scmp.ne.s32.totalorder %s224, %s225
      %p236 = scmp.eq.s32.totalorder %s22, 0
      %p237 = por %p235, %p236
      %p238 = scmp.ne.s32.totalorder %s224, %s225
      %p239 = scmp.eq.s32.totalorder %s23, 1
      %p240 = por %p238, %p239
      %p242 = scmp.ne.s32.totalorder %s225, %s241
      %p243 = scmp.eq.s32.totalorder %s23, 0
      %p244 = por %p242, %p243
      %p245 = scmp.le.s32.totalorder 1, %s17
      %p246 = scmp.lt.s32.totalorder %s17, 3
      %p247 = pnand %p245, %p246
      %p248 = pneg %p247
      // Predicated region
      $region9: #{tpu_custom_call.1} parent=5 // pred_check
        _
      $region10: #{tpu_custom_call.1} parent=5 // pred_check_branch
        %250 = sbr.rel (%p247) target = $region12
      $region11: #{tpu_custom_call.1} parent=5 // pred_region
        %s251 = ssub.s32 %s17, 1
        // Predicated region
        $region13: #{tpu_custom_call.1} parent=11 // pred_check
          %p252 = pneg %p146
        $region14: #{tpu_custom_call.1} parent=11 // pred_check_branch
          %254 = sbr.rel (%p252) target = $region16
        $region15: #{tpu_custom_call.1} parent=11 // pred_region
          _
        $region16: #{tpu_custom_call.1} parent=11 // pred_fallthru
          _
        // Predicated region
        $region17: #{tpu_custom_call.1} parent=11 // pred_check
          %p255 = pneg %p167
        $region18: #{tpu_custom_call.1} parent=11 // pred_check_branch
          %257 = sbr.rel (%p255) target = $region20
        $region19: #{tpu_custom_call.1} parent=11 // pred_region
          _
        $region20: #{tpu_custom_call.1} parent=11 // pred_fallthru
          _
        // Predicated region
        $region21: #{tpu_custom_call.1} parent=11 // pred_check
          %p258 = pneg %p188
        $region22: #{tpu_custom_call.1} parent=11 // pred_check_branch
          %260 = sbr.rel (%p258) target = $region24
        $region23: #{tpu_custom_call.1} parent=11 // pred_region
          %s262 = ssub.s32 24576, 24576
          %263 = vsyncadd [#allocation8], %s262
          %s264 = sshll.u32 [#allocation7], 4
          %s265 = int_to_ptr.vmem [resolvable:$true] %s264
          %270 = dma.hbm_to_vmem [thread:$0]  %s5, 24576, %s265, [#allocation8], 128, 128, 8
        $region24: #{tpu_custom_call.1} parent=11 // pred_fallthru
          _
        // Predicated region
        $region25: #{tpu_custom_call.1} parent=11 // pred_check
          %p271 = pneg %p209
        $region26: #{tpu_custom_call.1} parent=11 // pred_check_branch
          %273 = sbr.rel (%p271) target = $region28
        $region27: #{tpu_custom_call.1} parent=11 // pred_region
          _
        $region28: #{tpu_custom_call.1} parent=11 // pred_fallthru
          _
      $region12: #{tpu_custom_call.1} parent=5 // pred_fallthru
        _
      %p274 = scmp.lt.s32.totalorder %s17, 2
      // Predicated region
      $region29: #{tpu_custom_call.1} parent=5 // pred_check
        %p275 = pneg %p274
      $region30: #{tpu_custom_call.1} parent=5 // pred_check_branch
        %277 = sbr.rel (%p275) target = $region32
      $region31: #{tpu_custom_call.1} parent=5 // pred_region
        // Predicated region
        $region33: #{tpu_custom_call.1} parent=31 // pred_check
          %p278 = pneg %p57
        $region34: #{tpu_custom_call.1} parent=31 // pred_check_branch
          %280 = sbr.rel (%p278) target = $region36
        $region35: #{tpu_custom_call.1} parent=31 // pred_region
          %s281 = ssub.s32 %s25, 1
          %p282 = scmp.gt.s32.totalorder %s281, 0
          %s283 = scalar_select %p282, %s281, 0
          %s284 = smul.u32 2, %s283
          %p285 = scmp.lt.s32.totalorder %s24, 1
          %s286 = scalar_select %p285, %s24, 1
          %p287 = scmp.lt.s32.totalorder %s284, 1
          %s288 = scalar_select %p287, %s284, 1
          %s289 = smul.addr %s286, 2
          %s290 = sadd.s32 %s288, %s289
          %s291 = smul.addr %s290, 8
          %s292 = scalar_lea.vmem %s0, %s291
          %s293 = ssub.s32 %s25, 1
          %p294 = scmp.gt.s32.totalorder %s293, 0
          %s295 = scalar_select %p294, %s293, 0
          %s296 = smul.u32 2, %s295
        $region36: #{tpu_custom_call.1} parent=31 // pred_fallthru
          _
        // Predicated region
        $region37: #{tpu_custom_call.1} parent=31 // pred_check
          %p297 = pneg %p85
        $region38: #{tpu_custom_call.1} parent=31 // pred_check_branch
          %299 = sbr.rel (%p297) target = $region40
        $region39: #{tpu_custom_call.1} parent=31 // pred_region
          %s300 = smul.u32 2, %s25
          %p301 = scmp.lt.s32.totalorder %s24, 1
          %s302 = scalar_select %p301, %s24, 1
          %p303 = scmp.lt.s32.totalorder %s300, 1
          %s304 = scalar_select %p303, %s300, 1
          %s305 = smul.addr %s302, 2
          %s306 = sadd.s32 %s304, %s305
          %s307 = smul.addr %s306, 8
          %s308 = scalar_lea.vmem %s1, %s307
          %s309 = smul.u32 2, %s25
        $region40: #{tpu_custom_call.1} parent=31 // pred_fallthru
          _
        // Predicated region
        $region41: #{tpu_custom_call.1} parent=31 // pred_check
          %p310 = pneg %p119
        $region42: #{tpu_custom_call.1} parent=31 // pred_check_branch
          %312 = sbr.rel (%p310) target = $region44
        $region43: #{tpu_custom_call.1} parent=31 // pred_region
          %s313 = sadd.s32 %s25, 1
          %p314 = scmp.lt.s32.totalorder %s313, 0
          %s315 = scalar_select %p314, %s313, 0
          %s316 = smul.u32 2, %s315
          %p317 = scmp.lt.s32.totalorder %s24, 1
          %s318 = scalar_select %p317, %s24, 1
          %p319 = scmp.lt.s32.totalorder %s316, 1
          %s320 = scalar_select %p319, %s316, 1
          %s321 = smul.addr %s318, 2
          %s322 = sadd.s32 %s320, %s321
          %s323 = smul.addr %s322, 8
          %s324 = scalar_lea.vmem %s2, %s323
          %s325 = sadd.s32 %s25, 1
          %p326 = scmp.lt.s32.totalorder %s325, 0
          %s327 = scalar_select %p326, %s325, 0
          %s328 = smul.u32 2, %s327
        $region44: #{tpu_custom_call.1} parent=31 // pred_fallthru
          _
      $region32: #{tpu_custom_call.1} parent=5 // pred_fallthru
        _
      %p329 = scmp.le.s32.totalorder 1, %s17
      %p330 = scmp.lt.s32.totalorder %s17, 3
      %p331 = pnand %p329, %p330
      %p332 = pneg %p331
      // Predicated region
      $region45: #{tpu_custom_call.1} parent=5 // pred_check
        _
      $region46: #{tpu_custom_call.1} parent=5 // pred_check_branch
        %334 = sbr.rel (%p331) target = $region48
      $region47: #{tpu_custom_call.1} parent=5 // pred_region
        %s335 = ssub.s32 %s17, 1
        // Predicated region
        $region49: #{tpu_custom_call.1} parent=47 // pred_check
          %p336 = pneg %p188
        $region50: #{tpu_custom_call.1} parent=47 // pred_check_branch
          %338 = sbr.rel (%p336) target = $region52
        $region51: #{tpu_custom_call.1} parent=47 // pred_region
          %339 = dma.done [#allocation8], 24576
        $region52: #{tpu_custom_call.1} parent=47 // pred_fallthru
          _
        %s340 = ssub.s32 %s27, 1
        %p341 = scmp.gt.s32.totalorder %s340, 0
        %s342 = scalar_select %p341, %s340, 0
        %s343 = smul.u32 2, %s342
        %p344 = scmp.lt.s32.totalorder %s26, 1
        %s345 = scalar_select %p344, %s26, 1
        %p346 = scmp.lt.s32.totalorder %s343, 1
        %s347 = scalar_select %p346, %s343, 1
        %s348 = smul.addr %s345, 2
        %s349 = sadd.s32 %s347, %s348
        %s350 = smul.addr %s349, 8
        %s351 = scalar_lea.vmem %s0, %s350
        %p352 = pneg %p63
        %p353 = pneg %p60
        %s354 = smul.u32 2, %s27
        %p355 = scmp.lt.s32.totalorder %s26, 1
        %s356 = scalar_select %p355, %s26, 1
        %p357 = scmp.lt.s32.totalorder %s354, 1
        %s358 = scalar_select %p357, %s354, 1
        %s359 = smul.addr %s356, 2
        %s360 = sadd.s32 %s358, %s359
        %s361 = smul.addr %s360, 8
        %s362 = scalar_lea.vmem %s1, %s361
        %p363 = pneg %p91
        %p364 = pneg %p88
        %s365 = sadd.s32 %s27, 1
        %p366 = scmp.lt.s32.totalorder %s365, 0
        %s367 = scalar_select %p366, %s365, 0
        %s368 = smul.u32 2, %s367
        %p369 = scmp.lt.s32.totalorder %s26, 1
        %s370 = scalar_select %p369, %s26, 1
        %p371 = scmp.lt.s32.totalorder %s368, 1
        %s372 = scalar_select %p371, %s368, 1
        %s373 = smul.addr %s370, 2
        %s374 = sadd.s32 %s372, %s373
        %s375 = smul.addr %s374, 8
        %s376 = scalar_lea.vmem %s2, %s375
        %p377 = pneg %p125
        %p378 = pneg %p122
        %p379 = pneg %p146
        %p380 = pneg %p143
        %p381 = pneg %p167
        %p382 = pneg %p164
        %p383 = pneg %p188
        %p384 = pneg %p185
        %p385 = pneg %p209
        %p386 = pneg %p206
        %p387 = pneg %p237
        %p388 = pneg %p234
        %s389 = sand.u32 %s224, 1
        %s390 = scalar_lea.sflag [#allocation9], %s389
        %s391 = sand.u32 %s224, 1
        %s392 = smul.addr %s391, 16
        %s393 = scalar_lea.vmem [#allocation10], %s392
        %s394 = ssub.s32 %s27, 1
        %p395 = scmp.gt.s32.totalorder %s394, 0
        %s396 = scalar_select %p395, %s394, 0
        %s397 = smul.u32 2, %s396
        %p398 = scmp.lt.s32.totalorder %s26, 1
        %s399 = scalar_select %p398, %s26, 1
        %p400 = scmp.lt.s32.totalorder %s397, 1
        %s401 = scalar_select %p400, %s397, 1
        %s402 = smul.addr %s399, 2
        %s403 = sadd.s32 %s401, %s402
        %s404 = smul.addr %s403, 8
        %s405 = scalar_lea.vmem %s0, %s404
        %s406 = ssub.s32 %s27, 1
        %p407 = scmp.gt.s32.totalorder %s406, 0
        %s408 = scalar_select %p407, %s406, 0
        %s409 = smul.u32 2, %s408
        %s410 = smul.u32 2, %s27
        %p411 = scmp.lt.s32.totalorder %s26, 1
        %s412 = scalar_select %p411, %s26, 1
        %p413 = scmp.lt.s32.totalorder %s410, 1
        %s414 = scalar_select %p413, %s410, 1
        %s415 = smul.addr %s412, 2
        %s416 = sadd.s32 %s414, %s415
        %s417 = smul.addr %s416, 8
        %s418 = scalar_lea.vmem %s1, %s417
        %s419 = smul.u32 2, %s27
        %s420 = sadd.s32 %s27, 1
        %p421 = scmp.lt.s32.totalorder %s420, 0
        %s422 = scalar_select %p421, %s420, 0
        %s423 = smul.u32 2, %s422
        %p424 = scmp.lt.s32.totalorder %s26, 1
        %s425 = scalar_select %p424, %s26, 1
        %p426 = scmp.lt.s32.totalorder %s423, 1
        %s427 = scalar_select %p426, %s423, 1
        %s428 = smul.addr %s425, 2
        %s429 = sadd.s32 %s427, %s428
        %s430 = smul.addr %s429, 8
        %s431 = scalar_lea.vmem %s2, %s430
        %s432 = sadd.s32 %s27, 1
        %p433 = scmp.lt.s32.totalorder %s432, 0
        %s434 = scalar_select %p433, %s432, 0
        %s435 = smul.u32 2, %s434
        %s436 = smul.u32 2, %s27
        %s437 = smul.u32 %s27, 16
        %p438 = scmp.eq.s32.totalorder %s27, 0
        %s439 = sadd.s32 %s27, 1
        %s440 = smul.u32 %s439, 16
        %s441 = sadd.s32 %s440, 5
        %p442 = scmp.gt.s32.totalorder %s441, 16
        %p443 = por %p438, %p442
        %v444 = vld [vmem:[%s405] sm:$0xff]
        %v445 = vld [vmem:[%s405 + $0x8] sm:$0xff]
        %vm446 = vcmask 31744
        %447 = vst.msk [vmem:[#allocation2] sm:$0xff] %vm446, %v444
        %448 = vst.msk [vmem:[#allocation2 + $0x8] sm:$0xff] %vm446, %v445
        %v449 = vld [vmem:[%s418] sm:$0xff]
        %v450 = vld [vmem:[%s418 + $0x8] sm:$0xff]
        %451 = vst.msk [vmem:[#allocation2 + $0x10] sm:$0xff] %vm446, %v449
        %452 = vst.msk [vmem:[#allocation2 + $0x18] sm:$0xff] %vm446, %v450
        %v453 = vld [vmem:[%s431] sm:$0xff]
        %v454 = vld [vmem:[%s431 + $0x8] sm:$0xff]
        %455 = vst.msk [vmem:[#allocation2 + $0x20] sm:$0xff] %vm446, %v453
        %456 = vst.msk [vmem:[#allocation2 + $0x28] sm:$0xff] %vm446, %v454
        // Predicated region
        $region53: #{tpu_custom_call.1} parent=47 // pred_check
          %p457 = pneg %p443
        $region54: #{tpu_custom_call.1} parent=47 // pred_check_branch
          %459 = sbr.rel (%p457) target = $region56
        $region55: #{tpu_custom_call.1} parent=47 // pred_region
          %v460 = vld [vmem:[#allocation2] sm:$0xff]
          %v461 = vld [vmem:[#allocation2 + $0x8] sm:$0xff]
          %v462 = vld [vmem:[#allocation2 + $0x10] sm:$0xff]
          %v463 = vld [vmem:[#allocation2 + $0x18] sm:$0xff]
          %v464 = vld [vmem:[#allocation2 + $0x20] sm:$0xff]
          %v465 = vld [vmem:[#allocation2 + $0x28] sm:$0xff]
          %s466 = ssub.s32 %s437, 16
          %v467 = vlaneseq
          %v468 = vshrl.u32 %v467, 7
          %v469 = vadd.s32 %v468, 8
          %v470 = vadd.s32 %v468, 16
          %v471 = vadd.s32 %v468, 24
          %v472 = vadd.s32 %v468, 32
          %v473 = vadd.s32 %v468, 40
          %v474 = vstv %s466
          %v475 = vadd.s32 %v474, %v468
          %v476 = vadd.s32 %v474, %v469
          %v477 = vadd.s32 %v474, %v470
          %v478 = vadd.s32 %v474, %v471
          %v479 = vadd.s32 %v474, %v472
          %v480 = vadd.s32 %v474, %v473
          %vm481 = vcmp.ge.s32.totalorder %v475, 0
          %vm482 = vcmp.ge.s32.totalorder %v476, 0
          %vm483 = vcmp.ge.s32.totalorder %v477, 0
          %vm484 = vcmp.ge.s32.totalorder %v478, 0
          %vm485 = vcmp.ge.s32.totalorder %v479, 0
          %vm486 = vcmp.ge.s32.totalorder %v480, 0
          %vm487 = vcmp.lt.s32.totalorder %v475, 16
          %vm488 = vcmp.lt.s32.totalorder %v476, 16
          %vm489 = vcmp.lt.s32.totalorder %v477, 16
          %vm490 = vcmp.lt.s32.totalorder %v478, 16
          %vm491 = vcmp.lt.s32.totalorder %v479, 16
          %vm492 = vcmp.lt.s32.totalorder %v480, 16
          %vm493 = vmand %vm481, %vm487
          %vm494 = vmand %vm482, %vm488
          %vm495 = vmand %vm483, %vm489
          %vm496 = vmand %vm484, %vm490
          %vm497 = vmand %vm485, %vm491
          %vm498 = vmand %vm486, %vm492
          %v499 = vsel %vm493, 1, 0
          %v500 = vsel %vm494, 1, 0
          %v501 = vsel %vm495, 1, 0
          %v502 = vsel %vm496, 1, 0
          %v503 = vsel %vm497, 1, 0
          %v504 = vsel %vm498, 1, 0
          %vm505 = vcmp.eq.s32.totalorder %v499, 1
          %vm506 = vcmp.eq.s32.totalorder %v500, 1
          %vm507 = vcmp.eq.s32.totalorder %v501, 1
          %vm508 = vcmp.eq.s32.totalorder %v502, 1
          %vm509 = vcmp.eq.s32.totalorder %v503, 1
          %vm510 = vcmp.eq.s32.totalorder %v504, 1
          %v511 = vsel %vm505, %v460, 0.0
          %v512 = vsel %vm506, %v461, 0.0
          %v513 = vsel %vm507, %v462, 0.0
          %v514 = vsel %vm508, %v463, 0.0
          %v515 = vsel %vm509, %v464, 0.0
          %v516 = vsel %vm510, %v465, 0.0
          %517 = vst.msk [vmem:[#allocation2] sm:$0xff] %vm446, %v511
          %518 = vst.msk [vmem:[#allocation2 + $0x8] sm:$0xff] %vm446, %v512
          %519 = vst.msk [vmem:[#allocation2 + $0x10] sm:$0xff] %vm446, %v513
          %520 = vst.msk [vmem:[#allocation2 + $0x18] sm:$0xff] %vm446, %v514
          %521 = vst.msk [vmem:[#allocation2 + $0x20] sm:$0xff] %vm446, %v515
          %522 = vst.msk [vmem:[#allocation2 + $0x28] sm:$0xff] %vm446, %v516
        $region56: #{tpu_custom_call.1} parent=47 // pred_fallthru
          _
        %v523 = vld [vmem:[#allocation2 + $0xb] sm:$0xff]
        %v524 = vld [vmem:[#allocation2 + $0x13] sm:$0xff]
        %v525 = vld [vmem:[#allocation2 + $0x1b] sm:$0xff]
        %v526 = vld [vmem:[%s3] sm:$0xf]
        %v527 = vld [vmem:[#allocation2 + $0xc] sm:$0xff]
        %v528 = vld [vmem:[#allocation2 + $0x14] sm:$0xff]
        %v529 = vld [vmem:[#allocation2 + $0x1c] sm:$0xff]
        %s530 = scalar_lea.vmem %s3, 4
        %v531 = vld [vmem:[%s530] sm:$0xf]
        %v533 = vsel %vm446, %v527, 0
        %v536 = vsel %vm446, %v528, 0
        %v539 = vsel %vm446, %v529, 0
        %vm541 = vcmask 1043456
        %v543 = vsel %vm541, %v531, 0
        %545 = vmatprep.subr.mxu0 0.0
        %546 = vmatpush1.msra.mxu0 0.0
        %547 = vmatprep.subr.mxu0 0.0
        %548 = vmatpush1.msra.mxu0 0.0
        %549 = vmatprep.subr.mxu0 0.0
        %550 = vmatpush1.msra.mxu0 0.0
        %551 = vmatprep.subr.mxu0 0.0
        %552 = vmatpush1.msra.mxu0 0.0
        %553 = vmatprep.subr.mxu0 0.0
        %554 = vmatpush1.msra.mxu0 0.0
        %555 = vmatprep.subr.mxu0 0.0
        %556 = vmatpush1.msra.mxu0 0.0
        %557 = vmatprep.subr.mxu0 0.0
        %558 = vmatpush1.msra.mxu0 0.0
        %559 = vmatprep.subr.mxu0 0.0
        %560 = vmatpush1.msra.mxu0 0.0
        %561 = vmatprep.subr.mxu0 0.0
        %562 = vmatpush1.msra.mxu0 0.0
        %563 = vmatprep.subr.mxu0 0.0
        %564 = vmatpush1.msra.mxu0 0.0
        %565 = vmatprep.subr.mxu0 0.0
        %566 = vmatpush1.msra.mxu0 0.0
        %567 = vmatprep.subr.mxu0 0.0
        %568 = vmatpush1.msra.mxu0 0.0
        %569 = vmatprep.subr.mxu0 0.0
        %570 = vmatpush1.msra.mxu0 0.0
        %571 = vmatprep.subr.mxu0 0.0
        %572 = vmatpush1.msra.mxu0 0.0
        %573 = vmatprep.subr.mxu0 0.0
        %574 = vmatpush1.msra.mxu0 0.0
        %575 = vmatprep.subr.mxu0 0.0
        %576 = vmatpush1.msra.mxu0 %v543
        %577 = vmatprep.subr.mxu0 0.0
        %578 = vmatpush2.msra.mxu0 0.0
        %579 = vmatprep.subr.mxu0 0.0
        %580 = vmatpush2.msra.mxu0 0.0
        %581 = vmatprep.subr.mxu0 0.0
        %582 = vmatpush2.msra.mxu0 0.0
        %583 = vmatprep.subr.mxu0 0.0
        %584 = vmatpush2.msra.mxu0 0.0
        %585 = vmatprep.subr.mxu0 0.0
        %586 = vmatpush2.msra.mxu0 0.0
        %587 = vmatprep.subr.mxu0 0.0
        %588 = vmatpush2.msra.mxu0 0.0
        %589 = vmatprep.subr.mxu0 0.0
        %590 = vmatpush2.msra.mxu0 0.0
        %591 = vmatprep.subr.mxu0 0.0
        %592 = vmatpush2.msra.mxu0 0.0
        %593 = vmatprep.subr.mxu0 0.0
        %594 = vmatpush2.msra.mxu0 0.0
        %595 = vmatprep.subr.mxu0 0.0
        %596 = vmatpush2.msra.mxu0 0.0
        %597 = vmatprep.subr.mxu0 0.0
        %598 = vmatpush2.msra.mxu0 0.0
        %599 = vmatprep.subr.mxu0 0.0
        %600 = vmatpush2.msra.mxu0 0.0
        %601 = vmatprep.subr.mxu0 0.0
        %602 = vmatpush2.msra.mxu0 0.0
        %603 = vmatprep.subr.mxu0 0.0
        %604 = vmatpush2.msra.mxu0 0.0
        %605 = vmatprep.subr.mxu0 0.0
        %606 = vmatpush2.msra.mxu0 0.0
        %607 = vmatprep.subr.mxu0 0.0
        %608 = vmatpush2.msra.mxu0 0.0
        %609 = vmatprep.mubr.f32.mxu0 0.0
        %610 = vmatmul.mubr.f32.gmra.mxu0 %v533
        %v611 = vpop.f32.mrf.mxu0
        %v612 = vadd.f32 0.0, %v611
        %v613 = vpop.f32.mrf.mxu0
        %614 = vmatprep.mubr.f32.mxu0 0.0
        %615 = vmatmul.mubr.f32.gmra.mxu0 %v536
        %v616 = vpop.f32.mrf.mxu0
        %v617 = vadd.f32 0.0, %v616
        %v618 = vpop.f32.mrf.mxu0
        %619 = vmatprep.mubr.f32.mxu0 0.0
        %620 = vmatmul.mubr.f32.gmra.mxu0 %v539
        %v621 = vpop.f32.mrf.mxu0
        %v622 = vadd.f32 0.0, %v621
        %v623 = vpop.f32.mrf.mxu0
        %624 = vdwg.mxu0
        %v626 = vsel %vm446, %v523, 0
        %v629 = vsel %vm446, %v524, 0
        %v632 = vsel %vm446, %v525, 0
        %v635 = vsel %vm541, %v526, 0
        %637 = vmatprep.subr.mxu0 0.0
        %638 = vmatpush1.msra.mxu0 0.0
        %639 = vmatprep.subr.mxu0 0.0
        %640 = vmatpush1.msra.mxu0 0.0
        %641 = vmatprep.subr.mxu0 0.0
        %642 = vmatpush1.msra.mxu0 0.0
        %643 = vmatprep.subr.mxu0 0.0
        %644 = vmatpush1.msra.mxu0 0.0
        %645 = vmatprep.subr.mxu0 0.0
        %646 = vmatpush1.msra.mxu0 0.0
        %647 = vmatprep.subr.mxu0 0.0
        %648 = vmatpush1.msra.mxu0 0.0
        %649 = vmatprep.subr.mxu0 0.0
        %650 = vmatpush1.msra.mxu0 0.0
        %651 = vmatprep.subr.mxu0 0.0
        %652 = vmatpush1.msra.mxu0 0.0
        %653 = vmatprep.subr.mxu0 0.0
        %654 = vmatpush1.msra.mxu0 0.0
        %655 = vmatprep.subr.mxu0 0.0
        %656 = vmatpush1.msra.mxu0 0.0
        %657 = vmatprep.subr.mxu0 0.0
        %658 = vmatpush1.msra.mxu0 0.0
        %659 = vmatprep.subr.mxu0 0.0
        %660 = vmatpush1.msra.mxu0 0.0
        %661 = vmatprep.subr.mxu0 0.0
        %662 = vmatpush1.msra.mxu0 0.0
        %663 = vmatprep.subr.mxu0 0.0
        %664 = vmatpush1.msra.mxu0 0.0
        %665 = vmatprep.subr.mxu0 0.0
        %666 = vmatpush1.msra.mxu0 0.0
        %667 = vmatprep.subr.mxu0 0.0
        %668 = vmatpush1.msra.mxu0 %v635
        %669 = vmatprep.subr.mxu0 0.0
        %670 = vmatpush2.msra.mxu0 0.0
        %671 = vmatprep.subr.mxu0 0.0
        %672 = vmatpush2.msra.mxu0 0.0
        %673 = vmatprep.subr.mxu0 0.0
        %674 = vmatpush2.msra.mxu0 0.0
        %675 = vmatprep.subr.mxu0 0.0
        %676 = vmatpush2.msra.mxu0 0.0
        %677 = vmatprep.subr.mxu0 0.0
        %678 = vmatpush2.msra.mxu0 0.0
        %679 = vmatprep.subr.mxu0 0.0
        %680 = vmatpush2.msra.mxu0 0.0
        %681 = vmatprep.subr.mxu0 0.0
        %682 = vmatpush2.msra.mxu0 0.0
        %683 = vmatprep.subr.mxu0 0.0
        %684 = vmatpush2.msra.mxu0 0.0
        %685 = vmatprep.subr.mxu0 0.0
        %686 = vmatpush2.msra.mxu0 0.0
        %687 = vmatprep.subr.mxu0 0.0
        %688 = vmatpush2.msra.mxu0 0.0
        %689 = vmatprep.subr.mxu0 0.0
        %690 = vmatpush2.msra.mxu0 0.0
        %691 = vmatprep.subr.mxu0 0.0
        %692 = vmatpush2.msra.mxu0 0.0
        %693 = vmatprep.subr.mxu0 0.0
        %694 = vmatpush2.msra.mxu0 0.0
        %695 = vmatprep.subr.mxu0 0.0
        %696 = vmatpush2.msra.mxu0 0.0
        %697 = vmatprep.subr.mxu0 0.0
        %698 = vmatpush2.msra.mxu0 0.0
        %699 = vmatprep.subr.mxu0 0.0
        %700 = vmatpush2.msra.mxu0 0.0
        %701 = vmatprep.mubr.f32.mxu0 0.0
        %702 = vmatmul.mubr.f32.gmra.mxu0 %v626
        %v703 = vpop.f32.mrf.mxu0
        %v704 = vadd.f32 %v612, %v703
        %v705 = vpop.f32.mrf.mxu0
        %706 = vmatprep.mubr.f32.mxu0 0.0
        %707 = vmatmul.mubr.f32.gmra.mxu0 %v629
        %v708 = vpop.f32.mrf.mxu0
        %v709 = vadd.f32 %v617, %v708
        %v710 = vpop.f32.mrf.mxu0
        %711 = vmatprep.mubr.f32.mxu0 0.0
        %712 = vmatmul.mubr.f32.gmra.mxu0 %v632
        %v713 = vpop.f32.mrf.mxu0
        %v714 = vadd.f32 %v622, %v713
        %v715 = vpop.f32.mrf.mxu0
        %716 = vdwg.mxu0
        %v717 = vld [vmem:[#allocation2 + $0xd] sm:$0xff]
        %v718 = vld [vmem:[#allocation2 + $0x15] sm:$0xff]
        %v719 = vld [vmem:[#allocation2 + $0x1d] sm:$0xff]
        %s720 = scalar_lea.vmem %s3, 8
        %v721 = vld [vmem:[%s720] sm:$0xf]
        %v723 = vsel %vm446, %v717, 0
        %v726 = vsel %vm446, %v718, 0
        %v729 = vsel %vm446, %v719, 0
        %v732 = vsel %vm541, %v721, 0
        %734 = vmatprep.subr.mxu0 0.0
        %735 = vmatpush1.msra.mxu0 0.0
        %736 = vmatprep.subr.mxu0 0.0
        %737 = vmatpush1.msra.mxu0 0.0
        %738 = vmatprep.subr.mxu0 0.0
        %739 = vmatpush1.msra.mxu0 0.0
        %740 = vmatprep.subr.mxu0 0.0
        %741 = vmatpush1.msra.mxu0 0.0
        %742 = vmatprep.subr.mxu0 0.0
        %743 = vmatpush1.msra.mxu0 0.0
        %744 = vmatprep.subr.mxu0 0.0
        %745 = vmatpush1.msra.mxu0 0.0
        %746 = vmatprep.subr.mxu0 0.0
        %747 = vmatpush1.msra.mxu0 0.0
        %748 = vmatprep.subr.mxu0 0.0
        %749 = vmatpush1.msra.mxu0 0.0
        %750 = vmatprep.subr.mxu0 0.0
        %751 = vmatpush1.msra.mxu0 0.0
        %752 = vmatprep.subr.mxu0 0.0
        %753 = vmatpush1.msra.mxu0 0.0
        %754 = vmatprep.subr.mxu0 0.0
        %755 = vmatpush1.msra.mxu0 0.0
        %756 = vmatprep.subr.mxu0 0.0
        %757 = vmatpush1.msra.mxu0 0.0
        %758 = vmatprep.subr.mxu0 0.0
        %759 = vmatpush1.msra.mxu0 0.0
        %760 = vmatprep.subr.mxu0 0.0
        %761 = vmatpush1.msra.mxu0 0.0
        %762 = vmatprep.subr.mxu0 0.0
        %763 = vmatpush1.msra.mxu0 0.0
        %764 = vmatprep.subr.mxu0 0.0
        %765 = vmatpush1.msra.mxu0 %v732
        %766 = vmatprep.subr.mxu0 0.0
        %767 = vmatpush2.msra.mxu0 0.0
        %768 = vmatprep.subr.mxu0 0.0
        %769 = vmatpush2.msra.mxu0 0.0
        %770 = vmatprep.subr.mxu0 0.0
        %771 = vmatpush2.msra.mxu0 0.0
        %772 = vmatprep.subr.mxu0 0.0
        %773 = vmatpush2.msra.mxu0 0.0
        %774 = vmatprep.subr.mxu0 0.0
        %775 = vmatpush2.msra.mxu0 0.0
        %776 = vmatprep.subr.mxu0 0.0
        %777 = vmatpush2.msra.mxu0 0.0
        %778 = vmatprep.subr.mxu0 0.0
        %779 = vmatpush2.msra.mxu0 0.0
        %780 = vmatprep.subr.mxu0 0.0
        %781 = vmatpush2.msra.mxu0 0.0
        %782 = vmatprep.subr.mxu0 0.0
        %783 = vmatpush2.msra.mxu0 0.0
        %784 = vmatprep.subr.mxu0 0.0
        %785 = vmatpush2.msra.mxu0 0.0
        %786 = vmatprep.subr.mxu0 0.0
        %787 = vmatpush2.msra.mxu0 0.0
        %788 = vmatprep.subr.mxu0 0.0
        %789 = vmatpush2.msra.mxu0 0.0
        %790 = vmatprep.subr.mxu0 0.0
        %791 = vmatpush2.msra.mxu0 0.0
        %792 = vmatprep.subr.mxu0 0.0
        %793 = vmatpush2.msra.mxu0 0.0
        %794 = vmatprep.subr.mxu0 0.0
        %795 = vmatpush2.msra.mxu0 0.0
        %796 = vmatprep.subr.mxu0 0.0
        %797 = vmatpush2.msra.mxu0 0.0
        %798 = vmatprep.mubr.f32.mxu0 0.0
        %799 = vmatmul.mubr.f32.gmra.mxu0 %v723
        %v800 = vpop.f32.mrf.mxu0
        %v801 = vadd.f32 0.0, %v800
        %v802 = vpop.f32.mrf.mxu0
        %803 = vmatprep.mubr.f32.mxu0 0.0
        %804 = vmatmul.mubr.f32.gmra.mxu0 %v726
        %v805 = vpop.f32.mrf.mxu0
        %v806 = vadd.f32 0.0, %v805
        %v807 = vpop.f32.mrf.mxu0
        %808 = vmatprep.mubr.f32.mxu0 0.0
        %809 = vmatmul.mubr.f32.gmra.mxu0 %v729
        %v810 = vpop.f32.mrf.mxu0
        %v811 = vadd.f32 0.0, %v810
        %v812 = vpop.f32.mrf.mxu0
        %813 = vdwg.mxu0
        %v814 = vadd.f32 %v704, %v801
        %v815 = vadd.f32 %v709, %v806
        %v816 = vadd.f32 %v714, %v811
        %v817 = vld [vmem:[%s4] sm:$0x1]
        %v819 = vlaneseq
        %v820 = vshrl.u32 %v819, 7
        %v821 = vsub.s32 0, %v820
        %v822 = vrot.slane %v817, %v821
        %v824 = vadd.f32 %v814, %v822
        %v825 = vadd.f32 %v815, %v822
        %v826 = vadd.f32 %v816, %v822
        %827 = vst [vmem:[#allocation3] sm:$0xff] %v824
        %828 = vst [vmem:[#allocation3 + $0x8] sm:$0xff] %v825
        %829 = vst [vmem:[#allocation3 + $0x10] sm:$0xff] %v826
        // Predicated region
        $region57: #{tpu_custom_call.1} parent=47 // pred_check
          %p830 = pneg %p443
        $region58: #{tpu_custom_call.1} parent=47 // pred_check_branch
          %832 = sbr.rel (%p830) target = $region60
        $region59: #{tpu_custom_call.1} parent=47 // pred_region
          %v833 = vld [vmem:[#allocation3] sm:$0xff]
          %v834 = vld [vmem:[#allocation3 + $0x8] sm:$0xff]
          %v835 = vld [vmem:[#allocation3 + $0x10] sm:$0xff]
          %s836 = ssub.s32 %s437, 4
          %v837 = vlaneseq
          %v838 = vshrl.u32 %v837, 7
          %v839 = vadd.s32 %v838, 8
          %v840 = vadd.s32 %v838, 16
          %v841 = vstv %s836
          %v842 = vadd.s32 %v841, %v838
          %v843 = vadd.s32 %v841, %v839
          %v844 = vadd.s32 %v841, %v840
          %vm845 = vcmp.ge.s32.totalorder %v842, 0
          %vm846 = vcmp.ge.s32.totalorder %v843, 0
          %vm847 = vcmp.ge.s32.totalorder %v844, 0
          %vm848 = vcmp.lt.s32.totalorder %v842, 16
          %vm849 = vcmp.lt.s32.totalorder %v843, 16
          %vm850 = vcmp.lt.s32.totalorder %v844, 16
          %vm851 = vmand %vm845, %vm848
          %vm852 = vmand %vm846, %vm849
          %vm853 = vmand %vm847, %vm850
          %v854 = vsel %vm851, 1, 0
          %v855 = vsel %vm852, 1, 0
          %v856 = vsel %vm853, 1, 0
          %vm857 = vcmp.eq.s32.totalorder %v854, 1
          %vm858 = vcmp.eq.s32.totalorder %v855, 1
          %vm859 = vcmp.eq.s32.totalorder %v856, 1
          %v860 = vsel %vm857, %v833, 0.0
          %v861 = vsel %vm858, %v834, 0.0
          %v862 = vsel %vm859, %v835, 0.0
          %863 = vst [vmem:[#allocation3] sm:$0xff] %v860
          %864 = vst [vmem:[#allocation3 + $0x8] sm:$0xff] %v861
          %865 = vst [vmem:[#allocation3 + $0x10] sm:$0xff] %v862
        $region60: #{tpu_custom_call.1} parent=47 // pred_fallthru
          _
        %v866 = vld [vmem:[#allocation3] sm:$0xff]
        %v867 = vld [vmem:[#allocation3 + $0x8] sm:$0xff]
        %v868 = vld [vmem:[#allocation3 + $0x10] sm:$0x3f]
        %869 = vst [vmem:[#allocation6] sm:$0xff] %v866
        %870 = vst [vmem:[#allocation6 + $0x18] sm:$0xff] %v867
        %871 = vst [vmem:[#allocation6 + $0x30] sm:$0x3f] %v868
        %v872 = vld [vmem:[#allocation3 + $0x1] sm:$0xff]
        %v873 = vld [vmem:[#allocation3 + $0x9] sm:$0xff]
        %v874 = vld [vmem:[#allocation3 + $0x11] sm:$0x3f]
        %875 = vst [vmem:[#allocation6 + $0x8] sm:$0xff] %v872
        %876 = vst [vmem:[#allocation6 + $0x20] sm:$0xff] %v873
        %877 = vst [vmem:[#allocation6 + $0x38] sm:$0x3f] %v874
        %v878 = vld [vmem:[#allocation3 + $0x2] sm:$0xff]
        %v879 = vld [vmem:[#allocation3 + $0xa] sm:$0xff]
        %v880 = vld [vmem:[#allocation3 + $0x12] sm:$0x3f]
        %881 = vst [vmem:[#allocation6 + $0x10] sm:$0xff] %v878
        %882 = vst [vmem:[#allocation6 + $0x28] sm:$0xff] %v879
        %883 = vst [vmem:[#allocation6 + $0x40] sm:$0x3f] %v880
        %v884 = vld [vmem:[#allocation6] sm:$0xff]
        %v885 = vld [vmem:[#allocation6 + $0x8] sm:$0xff]
        %v886 = vld [vmem:[#allocation6 + $0x10] sm:$0xff]
        %v887 = vld [vmem:[#allocation6 + $0x18] sm:$0xff]
        %v888 = vld [vmem:[#allocation6 + $0x20] sm:$0xff]
        %v889 = vld [vmem:[#allocation6 + $0x28] sm:$0xff]
        %v890 = vld [vmem:[#allocation6 + $0x30] sm:$0x3f]
        %v891 = vld [vmem:[#allocation6 + $0x38] sm:$0x3f]
        %v892 = vld [vmem:[#allocation6 + $0x40] sm:$0x3f]
        %v893 = vld [vmem:[#allocation7] sm:$0xff]
        %v894 = vld [vmem:[#allocation7 + $0x8] sm:$0xff]
        %v895 = vld [vmem:[#allocation7 + $0x10] sm:$0xff]
        %v896 = vld [vmem:[#allocation7 + $0x18] sm:$0xff]
        %v897 = vld [vmem:[#allocation7 + $0x20] sm:$0xff]
        %v898 = vld [vmem:[#allocation7 + $0x28] sm:$0xff]
        %v899 = vld [vmem:[#allocation7 + $0x30] sm:$0xff]
        %v900 = vld [vmem:[#allocation7 + $0x38] sm:$0xff]
        %v901 = vld [vmem:[#allocation7 + $0x40] sm:$0xff]
        %v902 = vld [vmem:[#allocation7 + $0x48] sm:$0xff]
        %v903 = vld [vmem:[#allocation7 + $0x50] sm:$0xff]
        %v904 = vld [vmem:[#allocation7 + $0x58] sm:$0xff]
        %v905 = vld [vmem:[#allocation7 + $0x60] sm:$0xff]
        %v906 = vld [vmem:[#allocation7 + $0x68] sm:$0xff]
        %v907 = vld [vmem:[#allocation7 + $0x70] sm:$0xff]
        %v908 = vld [vmem:[#allocation7 + $0x78] sm:$0xff]
        %v909 = vld [vmem:[#allocation7 + $0x80] sm:$0xff]
        %v910 = vld [vmem:[#allocation7 + $0x88] sm:$0xff]
        %v911 = vld [vmem:[#allocation7 + $0x90] sm:$0xff]
        %v912 = vld [vmem:[#allocation7 + $0x98] sm:$0xff]
        %v913 = vld [vmem:[#allocation7 + $0xa0] sm:$0xff]
        %v914 = vld [vmem:[#allocation7 + $0xa8] sm:$0xff]
        %v915 = vld [vmem:[#allocation7 + $0xb0] sm:$0xff]
        %v916 = vld [vmem:[#allocation7 + $0xb8] sm:$0xff]
        %v917 = vld [vmem:[#allocation7 + $0xc0] sm:$0xff]
        %v918 = vld [vmem:[#allocation7 + $0xc8] sm:$0xff]
        %v919 = vld [vmem:[#allocation7 + $0xd0] sm:$0xff]
        %v920 = vld [vmem:[#allocation7 + $0xd8] sm:$0xff]
        %v921 = vld [vmem:[#allocation7 + $0xe0] sm:$0xff]
        %v922 = vld [vmem:[#allocation7 + $0xe8] sm:$0xff]
        %v923 = vld [vmem:[#allocation7 + $0xf0] sm:$0xff]
        %v924 = vld [vmem:[#allocation7 + $0xf8] sm:$0xff]
        %v925 = vld [vmem:[#allocation7 + $0x100] sm:$0xff]
        %v926 = vld [vmem:[#allocation7 + $0x108] sm:$0xff]
        %v927 = vld [vmem:[#allocation7 + $0x110] sm:$0xff]
        %v928 = vld [vmem:[#allocation7 + $0x118] sm:$0xff]
        %v929 = vld [vmem:[#allocation7 + $0x120] sm:$0xff]
        %v930 = vld [vmem:[#allocation7 + $0x128] sm:$0xff]
        %v931 = vld [vmem:[#allocation7 + $0x130] sm:$0xff]
        %v932 = vld [vmem:[#allocation7 + $0x138] sm:$0xff]
        %v933 = vld [vmem:[#allocation7 + $0x140] sm:$0xff]
        %v934 = vld [vmem:[#allocation7 + $0x148] sm:$0xff]
        %v935 = vld [vmem:[#allocation7 + $0x150] sm:$0xff]
        %v936 = vld [vmem:[#allocation7 + $0x158] sm:$0xff]
        %v937 = vld [vmem:[#allocation7 + $0x160] sm:$0xff]
        %v938 = vld [vmem:[#allocation7 + $0x168] sm:$0xff]
        %v939 = vld [vmem:[#allocation7 + $0x170] sm:$0xff]
        %v940 = vld [vmem:[#allocation7 + $0x178] sm:$0xff]
        %v941 = vld [vmem:[%s6] sm:$0x1]
        %v943 = vlaneseq
        %v944 = vshrl.u32 %v943, 7
        %v945 = vsub.s32 0, %v944
        %v946 = vrot.slane %v941, %v945
        %948 = vmatprep.subr.mxu0 0.0
        %949 = vmatpush1.msra.mxu0 %v908
        %950 = vmatprep.subr.mxu0 0.0
        %951 = vmatpush1.msra.mxu0 %v907
        %952 = vmatprep.subr.mxu0 0.0
        %953 = vmatpush1.msra.mxu0 %v906
        %954 = vmatprep.subr.mxu0 0.0
        %955 = vmatpush1.msra.mxu0 %v905
        %956 = vmatprep.subr.mxu0 0.0
        %957 = vmatpush1.msra.mxu0 %v904
        %958 = vmatprep.subr.mxu0 0.0
        %959 = vmatpush1.msra.mxu0 %v903
        %960 = vmatprep.subr.mxu0 0.0
        %961 = vmatpush1.msra.mxu0 %v902
        %962 = vmatprep.subr.mxu0 0.0
        %963 = vmatpush1.msra.mxu0 %v901
        %964 = vmatprep.subr.mxu0 0.0
        %965 = vmatpush1.msra.mxu0 %v900
        %966 = vmatprep.subr.mxu0 0.0
        %967 = vmatpush1.msra.mxu0 %v899
        %968 = vmatprep.subr.mxu0 0.0
        %969 = vmatpush1.msra.mxu0 %v898
        %970 = vmatprep.subr.mxu0 0.0
        %971 = vmatpush1.msra.mxu0 %v897
        %972 = vmatprep.subr.mxu0 0.0
        %973 = vmatpush1.msra.mxu0 %v896
        %974 = vmatprep.subr.mxu0 0.0
        %975 = vmatpush1.msra.mxu0 %v895
        %976 = vmatprep.subr.mxu0 0.0
        %977 = vmatpush1.msra.mxu0 %v894
        %978 = vmatprep.subr.mxu0 0.0
        %979 = vmatpush1.msra.mxu0 %v893
        %980 = vmatprep.subr.mxu0 0.0
        %981 = vmatpush2.msra.mxu0 %v924
        %982 = vmatprep.subr.mxu0 0.0
        %983 = vmatpush2.msra.mxu0 %v923
        %984 = vmatprep.subr.mxu0 0.0
        %985 = vmatpush2.msra.mxu0 %v922
        %986 = vmatprep.subr.mxu0 0.0
        %987 = vmatpush2.msra.mxu0 %v921
        %988 = vmatprep.subr.mxu0 0.0
        %989 = vmatpush2.msra.mxu0 %v920
        %990 = vmatprep.subr.mxu0 0.0
        %991 = vmatpush2.msra.mxu0 %v919
        %992 = vmatprep.subr.mxu0 0.0
        %993 = vmatpush2.msra.mxu0 %v918
        %994 = vmatprep.subr.mxu0 0.0
        %995 = vmatpush2.msra.mxu0 %v917
        %996 = vmatprep.subr.mxu0 0.0
        %997 = vmatpush2.msra.mxu0 %v916
        %998 = vmatprep.subr.mxu0 0.0
        %999 = vmatpush2.msra.mxu0 %v915
        %1000 = vmatprep.subr.mxu0 0.0
        %1001 = vmatpush2.msra.mxu0 %v914
        %1002 = vmatprep.subr.mxu0 0.0
        %1003 = vmatpush2.msra.mxu0 %v913
        %1004 = vmatprep.subr.mxu0 0.0
        %1005 = vmatpush2.msra.mxu0 %v912
        %1006 = vmatprep.subr.mxu0 0.0
        %1007 = vmatpush2.msra.mxu0 %v911
        %1008 = vmatprep.subr.mxu0 0.0
        %1009 = vmatpush2.msra.mxu0 %v910
        %1010 = vmatprep.subr.mxu0 0.0
        %1011 = vmatpush2.msra.mxu0 %v909
        %1012 = vmatprep.mubr.f32.mxu0 %v885
        %1013 = vmatmul.mubr.f32.gmra.mxu0 %v884
        %v1014 = vpop.f32.mrf.mxu0
        %v1015 = vadd.f32 %v946, %v1014
        %v1016 = vpop.f32.mrf.mxu0
        %1017 = vmatprep.mubr.f32.mxu0 %v888
        %1018 = vmatmul.mubr.f32.gmra.mxu0 %v887
        %v1019 = vpop.f32.mrf.mxu0
        %v1020 = vadd.f32 %v946, %v1019
        %v1021 = vpop.f32.mrf.mxu0
        %1022 = vmatprep.mubr.f32.mxu0 %v891
        %1023 = vmatmul.mubr.f32.gmra.mxu0 %v890
        %v1024 = vpop.f32.mrf.mxu0
        %v1025 = vadd.f32 %v946, %v1024
        %v1026 = vpop.f32.mrf.mxu0
        %1027 = vdwg.mxu0
        %1028 = vmatprep.subr.mxu0 0.0
        %1029 = vmatpush1.msra.mxu0 %v940
        %1030 = vmatprep.subr.mxu0 0.0
        %1031 = vmatpush1.msra.mxu0 %v939
        %1032 = vmatprep.subr.mxu0 0.0
        %1033 = vmatpush1.msra.mxu0 %v938
        %1034 = vmatprep.subr.mxu0 0.0
        %1035 = vmatpush1.msra.mxu0 %v937
        %1036 = vmatprep.subr.mxu0 0.0
        %1037 = vmatpush1.msra.mxu0 %v936
        %1038 = vmatprep.subr.mxu0 0.0
        %1039 = vmatpush1.msra.mxu0 %v935
        %1040 = vmatprep.subr.mxu0 0.0
        %1041 = vmatpush1.msra.mxu0 %v934
        %1042 = vmatprep.subr.mxu0 0.0
        %1043 = vmatpush1.msra.mxu0 %v933
        %1044 = vmatprep.subr.mxu0 0.0
        %1045 = vmatpush1.msra.mxu0 %v932
        %1046 = vmatprep.subr.mxu0 0.0
        %1047 = vmatpush1.msra.mxu0 %v931
        %1048 = vmatprep.subr.mxu0 0.0
        %1049 = vmatpush1.msra.mxu0 %v930
        %1050 = vmatprep.subr.mxu0 0.0
        %1051 = vmatpush1.msra.mxu0 %v929
        %1052 = vmatprep.subr.mxu0 0.0
        %1053 = vmatpush1.msra.mxu0 %v928
        %1054 = vmatprep.subr.mxu0 0.0
        %1055 = vmatpush1.msra.mxu0 %v927
        %1056 = vmatprep.subr.mxu0 0.0
        %1057 = vmatpush1.msra.mxu0 %v926
        %1058 = vmatprep.subr.mxu0 0.0
        %1059 = vmatpush1.msra.mxu0 %v925
        %1060 = vmatprep.subr.mxu0 0.0
        %1061 = vmatpush2.msra.mxu0 0.0
        %1062 = vmatprep.subr.mxu0 0.0
        %1063 = vmatpush2.msra.mxu0 0.0
        %1064 = vmatprep.subr.mxu0 0.0
        %1065 = vmatpush2.msra.mxu0 0.0
        %1066 = vmatprep.subr.mxu0 0.0
        %1067 = vmatpush2.msra.mxu0 0.0
        %1068 = vmatprep.subr.mxu0 0.0
        %1069 = vmatpush2.msra.mxu0 0.0
        %1070 = vmatprep.subr.mxu0 0.0
        %1071 = vmatpush2.msra.mxu0 0.0
        %1072 = vmatprep.subr.mxu0 0.0
        %1073 = vmatpush2.msra.mxu0 0.0
        %1074 = vmatprep.subr.mxu0 0.0
        %1075 = vmatpush2.msra.mxu0 0.0
        %1076 = vmatprep.subr.mxu0 0.0
        %1077 = vmatpush2.msra.mxu0 0.0
        %1078 = vmatprep.subr.mxu0 0.0
        %1079 = vmatpush2.msra.mxu0 0.0
        %1080 = vmatprep.subr.mxu0 0.0
        %1081 = vmatpush2.msra.mxu0 0.0
        %1082 = vmatprep.subr.mxu0 0.0
        %1083 = vmatpush2.msra.mxu0 0.0
        %1084 = vmatprep.subr.mxu0 0.0
        %1085 = vmatpush2.msra.mxu0 0.0
        %1086 = vmatprep.subr.mxu0 0.0
        %1087 = vmatpush2.msra.mxu0 0.0
        %1088 = vmatprep.subr.mxu0 0.0
        %1089 = vmatpush2.msra.mxu0 0.0
        %1090 = vmatprep.subr.mxu0 0.0
        %1091 = vmatpush2.msra.mxu0 0.0
        %1092 = vmatprep.mubr.f32.mxu0 0.0
        %1093 = vmatmul.mubr.f32.gmra.mxu0 %v886
        %v1094 = vpop.f32.mrf.mxu0
        %v1095 = vadd.f32 %v1015, %v1094
        %v1096 = vpop.f32.mrf.mxu0
        %1097 = vmatprep.mubr.f32.mxu0 0.0
        %1098 = vmatmul.mubr.f32.gmra.mxu0 %v889
        %v1099 = vpop.f32.mrf.mxu0
        %v1100 = vadd.f32 %v1020, %v1099
        %v1101 = vpop.f32.mrf.mxu0
        %1102 = vmatprep.mubr.f32.mxu0 0.0
        %1103 = vmatmul.mubr.f32.gmra.mxu0 %v892
        %v1104 = vpop.f32.mrf.mxu0
        %v1105 = vadd.f32 %v1025, %v1104
        %v1106 = vpop.f32.mrf.mxu0
        %1107 = vdwg.mxu0
        %v1108 = vmax.f32 %v1095, 0.0
        %v1109 = vmax.f32 %v1100, 0.0
        %v1110 = vmax.f32 %v1105, 0.0
        %1111 = vst [vmem:[#allocation4] sm:$0xff] %v1108
        %1112 = vst [vmem:[#allocation4 + $0x8] sm:$0xff] %v1109
        %1113 = vst [vmem:[#allocation4 + $0x10] sm:$0x3f] %v1110
        // Predicated region
        $region61: #{tpu_custom_call.1} parent=47 // pred_check
          %p1114 = pneg %p443
        $region62: #{tpu_custom_call.1} parent=47 // pred_check_branch
          %1116 = sbr.rel (%p1114) target = $region64
        $region63: #{tpu_custom_call.1} parent=47 // pred_region
          %v1117 = vld [vmem:[#allocation4] sm:$0xff]
          %v1118 = vld [vmem:[#allocation4 + $0x8] sm:$0xff]
          %v1119 = vld [vmem:[#allocation4 + $0x10] sm:$0x3f]
          %s1120 = ssub.s32 %s437, 3
          %v1121 = vlaneseq
          %v1122 = vshrl.u32 %v1121, 7
          %v1123 = vadd.s32 %v1122, 8
          %v1124 = vadd.s32 %v1122, 16
          %v1125 = vstv %s1120
          %v1126 = vadd.s32 %v1125, %v1122
          %v1127 = vadd.s32 %v1125, %v1123
          %v1128 = vadd.s32 %v1125, %v1124
          %vm1129 = vcmp.ge.s32.totalorder %v1126, 0
          %vm1130 = vcmp.ge.s32.totalorder %v1127, 0
          %vm1131 = vcmp.ge.s32.totalorder %v1128, 0
          %vm1132 = vcmp.lt.s32.totalorder %v1126, 16
          %vm1133 = vcmp.lt.s32.totalorder %v1127, 16
          %vm1134 = vcmp.lt.s32.totalorder %v1128, 16
          %vm1135 = vmand %vm1129, %vm1132
          %vm1136 = vmand %vm1130, %vm1133
          %vm1137 = vmand %vm1131, %vm1134
          %v1138 = vsel %vm1135, 1, 0
          %v1139 = vsel %vm1136, 1, 0
          %v1140 = vsel %vm1137, 1, 0
          %vm1141 = vcmp.eq.s32.totalorder %v1138, 1
          %vm1142 = vcmp.eq.s32.totalorder %v1139, 1
          %vm1143 = vcmp.eq.s32.totalorder %v1140, 1
          %v1144 = vsel %vm1141, %v1117, 0.0
          %v1145 = vsel %vm1142, %v1118, 0.0
          %v1146 = vsel %vm1143, %v1119, 0.0
          %1147 = vst [vmem:[#allocation4] sm:$0xff] %v1144
          %1148 = vst [vmem:[#allocation4 + $0x8] sm:$0xff] %v1145
          %1149 = vst [vmem:[#allocation4 + $0x10] sm:$0x3f] %v1146
        $region64: #{tpu_custom_call.1} parent=47 // pred_fallthru
          _
        %v1150 = vld [vmem:[#allocation4] sm:$0xff]
        %v1151 = vld [vmem:[#allocation4 + $0x8] sm:$0xff]
        %v1152 = vld [vmem:[#allocation4 + $0x10] sm:$0xf]
        %1153 = vst [vmem:[#allocation6] sm:$0xff] %v1150
        %1154 = vst [vmem:[#allocation6 + $0x18] sm:$0xff] %v1151
        %1155 = vst [vmem:[#allocation6 + $0x30] sm:$0xf] %v1152
        %v1156 = vld [vmem:[#allocation4 + $0x1] sm:$0xff]
        %v1157 = vld [vmem:[#allocation4 + $0x9] sm:$0xff]
        %v1158 = vld [vmem:[#allocation4 + $0x11] sm:$0xf]
        %1159 = vst [vmem:[#allocation6 + $0x8] sm:$0xff] %v1156
        %1160 = vst [vmem:[#allocation6 + $0x20] sm:$0xff] %v1157
        %1161 = vst [vmem:[#allocation6 + $0x38] sm:$0xf] %v1158
        %v1162 = vld [vmem:[#allocation4 + $0x2] sm:$0xff]
        %v1163 = vld [vmem:[#allocation4 + $0xa] sm:$0xff]
        %v1164 = vld [vmem:[#allocation4 + $0x12] sm:$0xf]
        %1165 = vst [vmem:[#allocation6 + $0x10] sm:$0xff] %v1162
        %1166 = vst [vmem:[#allocation6 + $0x28] sm:$0xff] %v1163
        %1167 = vst [vmem:[#allocation6 + $0x40] sm:$0xf] %v1164
        %v1168 = vld [vmem:[#allocation6] sm:$0xff]
        %v1169 = vld [vmem:[#allocation6 + $0x8] sm:$0xff]
        %v1170 = vld [vmem:[#allocation6 + $0x10] sm:$0xff]
        %v1171 = vld [vmem:[#allocation6 + $0x18] sm:$0xff]
        %v1172 = vld [vmem:[#allocation6 + $0x20] sm:$0xff]
        %v1173 = vld [vmem:[#allocation6 + $0x28] sm:$0xff]
        %v1174 = vld [vmem:[#allocation6 + $0x30] sm:$0xf]
        %v1175 = vld [vmem:[#allocation6 + $0x38] sm:$0xf]
        %v1176 = vld [vmem:[#allocation6 + $0x40] sm:$0xf]
        %s1177 = scalar_lea.vmem [#allocation7], 384
        %v1178 = vld [vmem:[%s1177] sm:$0xff]
        %v1179 = vld [vmem:[%s1177 + $0x8] sm:$0xff]
        %v1180 = vld [vmem:[%s1177 + $0x10] sm:$0xff]
        %v1181 = vld [vmem:[%s1177 + $0x18] sm:$0xff]
        %v1182 = vld [vmem:[%s1177 + $0x20] sm:$0xff]
        %v1183 = vld [vmem:[%s1177 + $0x28] sm:$0xff]
        %v1184 = vld [vmem:[%s1177 + $0x30] sm:$0xff]
        %v1185 = vld [vmem:[%s1177 + $0x38] sm:$0xff]
        %v1186 = vld [vmem:[%s1177 + $0x40] sm:$0xff]
        %v1187 = vld [vmem:[%s1177 + $0x48] sm:$0xff]
        %v1188 = vld [vmem:[%s1177 + $0x50] sm:$0xff]
        %v1189 = vld [vmem:[%s1177 + $0x58] sm:$0xff]
        %v1190 = vld [vmem:[%s1177 + $0x60] sm:$0xff]
        %v1191 = vld [vmem:[%s1177 + $0x68] sm:$0xff]
        %v1192 = vld [vmem:[%s1177 + $0x70] sm:$0xff]
        %v1193 = vld [vmem:[%s1177 + $0x78] sm:$0xff]
        %v1194 = vld [vmem:[%s1177 + $0x80] sm:$0xff]
        %v1195 = vld [vmem:[%s1177 + $0x88] sm:$0xff]
        %v1196 = vld [vmem:[%s1177 + $0x90] sm:$0xff]
        %v1197 = vld [vmem:[%s1177 + $0x98] sm:$0xff]
        %v1198 = vld [vmem:[%s1177 + $0xa0] sm:$0xff]
        %v1199 = vld [vmem:[%s1177 + $0xa8] sm:$0xff]
        %v1200 = vld [vmem:[%s1177 + $0xb0] sm:$0xff]
        %v1201 = vld [vmem:[%s1177 + $0xb8] sm:$0xff]
        %v1202 = vld [vmem:[%s1177 + $0xc0] sm:$0xff]
        %v1203 = vld [vmem:[%s1177 + $0xc8] sm:$0xff]
        %v1204 = vld [vmem:[%s1177 + $0xd0] sm:$0xff]
        %v1205 = vld [vmem:[%s1177 + $0xd8] sm:$0xff]
        %v1206 = vld [vmem:[%s1177 + $0xe0] sm:$0xff]
        %v1207 = vld [vmem:[%s1177 + $0xe8] sm:$0xff]
        %v1208 = vld [vmem:[%s1177 + $0xf0] sm:$0xff]
        %v1209 = vld [vmem:[%s1177 + $0xf8] sm:$0xff]
        %v1210 = vld [vmem:[%s1177 + $0x100] sm:$0xff]
        %v1211 = vld [vmem:[%s1177 + $0x108] sm:$0xff]
        %v1212 = vld [vmem:[%s1177 + $0x110] sm:$0xff]
        %v1213 = vld [vmem:[%s1177 + $0x118] sm:$0xff]
        %v1214 = vld [vmem:[%s1177 + $0x120] sm:$0xff]
        %v1215 = vld [vmem:[%s1177 + $0x128] sm:$0xff]
        %v1216 = vld [vmem:[%s1177 + $0x130] sm:$0xff]
        %v1217 = vld [vmem:[%s1177 + $0x138] sm:$0xff]
        %v1218 = vld [vmem:[%s1177 + $0x140] sm:$0xff]
        %v1219 = vld [vmem:[%s1177 + $0x148] sm:$0xff]
        %v1220 = vld [vmem:[%s1177 + $0x150] sm:$0xff]
        %v1221 = vld [vmem:[%s1177 + $0x158] sm:$0xff]
        %v1222 = vld [vmem:[%s1177 + $0x160] sm:$0xff]
        %v1223 = vld [vmem:[%s1177 + $0x168] sm:$0xff]
        %v1224 = vld [vmem:[%s1177 + $0x170] sm:$0xff]
        %v1225 = vld [vmem:[%s1177 + $0x178] sm:$0xff]
        %s1226 = scalar_lea.vmem %s6, 1
        %v1227 = vld [vmem:[%s1226] sm:$0x1]
        %v1229 = vlaneseq
        %v1230 = vshrl.u32 %v1229, 7
        %v1231 = vsub.s32 0, %v1230
        %v1232 = vrot.slane %v1227, %v1231
        %1234 = vmatprep.subr.mxu0 0.0
        %1235 = vmatpush1.msra.mxu0 %v1193
        %1236 = vmatprep.subr.mxu0 0.0
        %1237 = vmatpush1.msra.mxu0 %v1192
        %1238 = vmatprep.subr.mxu0 0.0
        %1239 = vmatpush1.msra.mxu0 %v1191
        %1240 = vmatprep.subr.mxu0 0.0
        %1241 = vmatpush1.msra.mxu0 %v1190
        %1242 = vmatprep.subr.mxu0 0.0
        %1243 = vmatpush1.msra.mxu0 %v1189
        %1244 = vmatprep.subr.mxu0 0.0
        %1245 = vmatpush1.msra.mxu0 %v1188
        %1246 = vmatprep.subr.mxu0 0.0
        %1247 = vmatpush1.msra.mxu0 %v1187
        %1248 = vmatprep.subr.mxu0 0.0
        %1249 = vmatpush1.msra.mxu0 %v1186
        %1250 = vmatprep.subr.mxu0 0.0
        %1251 = vmatpush1.msra.mxu0 %v1185
        %1252 = vmatprep.subr.mxu0 0.0
        %1253 = vmatpush1.msra.mxu0 %v1184
        %1254 = vmatprep.subr.mxu0 0.0
        %1255 = vmatpush1.msra.mxu0 %v1183
        %1256 = vmatprep.subr.mxu0 0.0
        %1257 = vmatpush1.msra.mxu0 %v1182
        %1258 = vmatprep.subr.mxu0 0.0
        %1259 = vmatpush1.msra.mxu0 %v1181
        %1260 = vmatprep.subr.mxu0 0.0
        %1261 = vmatpush1.msra.mxu0 %v1180
        %1262 = vmatprep.subr.mxu0 0.0
        %1263 = vmatpush1.msra.mxu0 %v1179
        %1264 = vmatprep.subr.mxu0 0.0
        %1265 = vmatpush1.msra.mxu0 %v1178
        %1266 = vmatprep.subr.mxu0 0.0
        %1267 = vmatpush2.msra.mxu0 %v1209
        %1268 = vmatprep.subr.mxu0 0.0
        %1269 = vmatpush2.msra.mxu0 %v1208
        %1270 = vmatprep.subr.mxu0 0.0
        %1271 = vmatpush2.msra.mxu0 %v1207
        %1272 = vmatprep.subr.mxu0 0.0
        %1273 = vmatpush2.msra.mxu0 %v1206
        %1274 = vmatprep.subr.mxu0 0.0
        %1275 = vmatpush2.msra.mxu0 %v1205
        %1276 = vmatprep.subr.mxu0 0.0
        %1277 = vmatpush2.msra.mxu0 %v1204
        %1278 = vmatprep.subr.mxu0 0.0
        %1279 = vmatpush2.msra.mxu0 %v1203
        %1280 = vmatprep.subr.mxu0 0.0
        %1281 = vmatpush2.msra.mxu0 %v1202
        %1282 = vmatprep.subr.mxu0 0.0
        %1283 = vmatpush2.msra.mxu0 %v1201
        %1284 = vmatprep.subr.mxu0 0.0
        %1285 = vmatpush2.msra.mxu0 %v1200
        %1286 = vmatprep.subr.mxu0 0.0
        %1287 = vmatpush2.msra.mxu0 %v1199
        %1288 = vmatprep.subr.mxu0 0.0
        %1289 = vmatpush2.msra.mxu0 %v1198
        %1290 = vmatprep.subr.mxu0 0.0
        %1291 = vmatpush2.msra.mxu0 %v1197
        %1292 = vmatprep.subr.mxu0 0.0
        %1293 = vmatpush2.msra.mxu0 %v1196
        %1294 = vmatprep.subr.mxu0 0.0
        %1295 = vmatpush2.msra.mxu0 %v1195
        %1296 = vmatprep.subr.mxu0 0.0
        %1297 = vmatpush2.msra.mxu0 %v1194
        %1298 = vmatprep.mubr.f32.mxu0 %v1169
        %1299 = vmatmul.mubr.f32.gmra.mxu0 %v1168
        %v1300 = vpop.f32.mrf.mxu0
        %v1301 = vadd.f32 %v1232, %v1300
        %v1302 = vpop.f32.mrf.mxu0
        %1303 = vmatprep.mubr.f32.mxu0 %v1172
        %1304 = vmatmul.mubr.f32.gmra.mxu0 %v1171
        %v1305 = vpop.f32.mrf.mxu0
        %v1306 = vadd.f32 %v1232, %v1305
        %v1307 = vpop.f32.mrf.mxu0
        %1308 = vmatprep.mubr.f32.mxu0 %v1175
        %1309 = vmatmul.mubr.f32.gmra.mxu0 %v1174
        %v1310 = vpop.f32.mrf.mxu0
        %v1311 = vadd.f32 %v1232, %v1310
        %v1312 = vpop.f32.mrf.mxu0
        %1313 = vdwg.mxu0
        %1314 = vmatprep.subr.mxu0 0.0
        %1315 = vmatpush1.msra.mxu0 %v1225
        %1316 = vmatprep.subr.mxu0 0.0
        %1317 = vmatpush1.msra.mxu0 %v1224
        %1318 = vmatprep.subr.mxu0 0.0
        %1319 = vmatpush1.msra.mxu0 %v1223
        %1320 = vmatprep.subr.mxu0 0.0
        %1321 = vmatpush1.msra.mxu0 %v1222
        %1322 = vmatprep.subr.mxu0 0.0
        %1323 = vmatpush1.msra.mxu0 %v1221
        %1324 = vmatprep.subr.mxu0 0.0
        %1325 = vmatpush1.msra.mxu0 %v1220
        %1326 = vmatprep.subr.mxu0 0.0
        %1327 = vmatpush1.msra.mxu0 %v1219
        %1328 = vmatprep.subr.mxu0 0.0
        %1329 = vmatpush1.msra.mxu0 %v1218
        %1330 = vmatprep.subr.mxu0 0.0
        %1331 = vmatpush1.msra.mxu0 %v1217
        %1332 = vmatprep.subr.mxu0 0.0
        %1333 = vmatpush1.msra.mxu0 %v1216
        %1334 = vmatprep.subr.mxu0 0.0
        %1335 = vmatpush1.msra.mxu0 %v1215
        %1336 = vmatprep.subr.mxu0 0.0
        %1337 = vmatpush1.msra.mxu0 %v1214
        %1338 = vmatprep.subr.mxu0 0.0
        %1339 = vmatpush1.msra.mxu0 %v1213
        %1340 = vmatprep.subr.mxu0 0.0
        %1341 = vmatpush1.msra.mxu0 %v1212
        %1342 = vmatprep.subr.mxu0 0.0
        %1343 = vmatpush1.msra.mxu0 %v1211
        %1344 = vmatprep.subr.mxu0 0.0
        %1345 = vmatpush1.msra.mxu0 %v1210
        %1346 = vmatprep.subr.mxu0 0.0
        %1347 = vmatpush2.msra.mxu0 0.0
        %1348 = vmatprep.subr.mxu0 0.0
        %1349 = vmatpush2.msra.mxu0 0.0
        %1350 = vmatprep.subr.mxu0 0.0
        %1351 = vmatpush2.msra.mxu0 0.0
        %1352 = vmatprep.subr.mxu0 0.0
        %1353 = vmatpush2.msra.mxu0 0.0
        %1354 = vmatprep.subr.mxu0 0.0
        %1355 = vmatpush2.msra.mxu0 0.0
        %1356 = vmatprep.subr.mxu0 0.0
        %1357 = vmatpush2.msra.mxu0 0.0
        %1358 = vmatprep.subr.mxu0 0.0
        %1359 = vmatpush2.msra.mxu0 0.0
        %1360 = vmatprep.subr.mxu0 0.0
        %1361 = vmatpush2.msra.mxu0 0.0
        %1362 = vmatprep.subr.mxu0 0.0
        %1363 = vmatpush2.msra.mxu0 0.0
        %1364 = vmatprep.subr.mxu0 0.0
        %1365 = vmatpush2.msra.mxu0 0.0
        %1366 = vmatprep.subr.mxu0 0.0
        %1367 = vmatpush2.msra.mxu0 0.0
        %1368 = vmatprep.subr.mxu0 0.0
        %1369 = vmatpush2.msra.mxu0 0.0
        %1370 = vmatprep.subr.mxu0 0.0
        %1371 = vmatpush2.msra.mxu0 0.0
        %1372 = vmatprep.subr.mxu0 0.0
        %1373 = vmatpush2.msra.mxu0 0.0
        %1374 = vmatprep.subr.mxu0 0.0
        %1375 = vmatpush2.msra.mxu0 0.0
        %1376 = vmatprep.subr.mxu0 0.0
        %1377 = vmatpush2.msra.mxu0 0.0
        %1378 = vmatprep.mubr.f32.mxu0 0.0
        %1379 = vmatmul.mubr.f32.gmra.mxu0 %v1170
        %v1380 = vpop.f32.mrf.mxu0
        %v1381 = vadd.f32 %v1301, %v1380
        %v1382 = vpop.f32.mrf.mxu0
        %1383 = vmatprep.mubr.f32.mxu0 0.0
        %1384 = vmatmul.mubr.f32.gmra.mxu0 %v1173
        %v1385 = vpop.f32.mrf.mxu0
        %v1386 = vadd.f32 %v1306, %v1385
        %v1387 = vpop.f32.mrf.mxu0
        %1388 = vmatprep.mubr.f32.mxu0 0.0
        %1389 = vmatmul.mubr.f32.gmra.mxu0 %v1176
        %v1390 = vpop.f32.mrf.mxu0
        %v1391 = vadd.f32 %v1311, %v1390
        %v1392 = vpop.f32.mrf.mxu0
        %1393 = vdwg.mxu0
        %v1394 = vmax.f32 %v1381, 0.0
        %v1395 = vmax.f32 %v1386, 0.0
        %v1396 = vmax.f32 %v1391, 0.0
        %v1397 = vld [vmem:[#allocation3 + $0x2] sm:$0xff]
        %v1398 = vld [vmem:[#allocation3 + $0xa] sm:$0xff]
        %v1399 = vld [vmem:[#allocation3 + $0x12] sm:$0xf]
        %v1400 = vmul.f32 %v1394, 0.1
        %v1401 = vmul.f32 %v1395, 0.1
        %v1402 = vmul.f32 %v1396, 0.1
        %v1403 = vadd.f32 %v1397, %v1400
        %v1404 = vadd.f32 %v1398, %v1401
        %v1405 = vadd.f32 %v1399, %v1402
        %1406 = vst [vmem:[#allocation5] sm:$0xff] %v1403
        %1407 = vst [vmem:[#allocation5 + $0x8] sm:$0xff] %v1404
        %1408 = vst [vmem:[#allocation5 + $0x10] sm:$0xf] %v1405
        // Predicated region
        $region65: #{tpu_custom_call.1} parent=47 // pred_check
          %p1409 = pneg %p443
        $region66: #{tpu_custom_call.1} parent=47 // pred_check_branch
          %1411 = sbr.rel (%p1409) target = $region68
        $region67: #{tpu_custom_call.1} parent=47 // pred_region
          %v1412 = vld [vmem:[#allocation5] sm:$0xff]
          %v1413 = vld [vmem:[#allocation5 + $0x8] sm:$0xff]
          %v1414 = vld [vmem:[#allocation5 + $0x10] sm:$0xf]
          %s1415 = ssub.s32 %s437, 2
          %v1416 = vlaneseq
          %v1417 = vshrl.u32 %v1416, 7
          %v1418 = vadd.s32 %v1417, 8
          %v1419 = vadd.s32 %v1417, 16
          %v1420 = vstv %s1415
          %v1421 = vadd.s32 %v1420, %v1417
          %v1422 = vadd.s32 %v1420, %v1418
          %v1423 = vadd.s32 %v1420, %v1419
          %vm1424 = vcmp.ge.s32.totalorder %v1421, 0
          %vm1425 = vcmp.ge.s32.totalorder %v1422, 0
          %vm1426 = vcmp.ge.s32.totalorder %v1423, 0
          %vm1427 = vcmp.lt.s32.totalorder %v1421, 16
          %vm1428 = vcmp.lt.s32.totalorder %v1422, 16
          %vm1429 = vcmp.lt.s32.totalorder %v1423, 16
          %vm1430 = vmand %vm1424, %vm1427
          %vm1431 = vmand %vm1425, %vm1428
          %vm1432 = vmand %vm1426, %vm1429
          %v1433 = vsel %vm1430, 1, 0
          %v1434 = vsel %vm1431, 1, 0
          %v1435 = vsel %vm1432, 1, 0
          %vm1436 = vcmp.eq.s32.totalorder %v1433, 1
          %vm1437 = vcmp.eq.s32.totalorder %v1434, 1
          %vm1438 = vcmp.eq.s32.totalorder %v1435, 1
          %v1439 = vsel %vm1436, %v1412, 0.0
          %v1440 = vsel %vm1437, %v1413, 0.0
          %v1441 = vsel %vm1438, %v1414, 0.0
          %1442 = vst [vmem:[#allocation5] sm:$0xff] %v1439
          %1443 = vst [vmem:[#allocation5 + $0x8] sm:$0xff] %v1440
          %1444 = vst [vmem:[#allocation5 + $0x10] sm:$0xf] %v1441
        $region68: #{tpu_custom_call.1} parent=47 // pred_fallthru
          _
        %v1445 = vld [vmem:[#allocation5] sm:$0xff]
        %v1446 = vld [vmem:[#allocation5 + $0x8] sm:$0xff]
        %v1447 = vld [vmem:[#allocation5 + $0x10] sm:$0x3]
        %1448 = vst [vmem:[#allocation6] sm:$0xff] %v1445
        %1449 = vst [vmem:[#allocation6 + $0x18] sm:$0xff] %v1446
        %1450 = vst [vmem:[#allocation6 + $0x30] sm:$0x3] %v1447
        %v1451 = vld [vmem:[#allocation5 + $0x1] sm:$0xff]
        %v1452 = vld [vmem:[#allocation5 + $0x9] sm:$0xff]
        %v1453 = vld [vmem:[#allocation5 + $0x11] sm:$0x3]
        %1454 = vst [vmem:[#allocation6 + $0x8] sm:$0xff] %v1451
        %1455 = vst [vmem:[#allocation6 + $0x20] sm:$0xff] %v1452
        %1456 = vst [vmem:[#allocation6 + $0x38] sm:$0x3] %v1453
        %v1457 = vld [vmem:[#allocation5 + $0x2] sm:$0xff]
        %v1458 = vld [vmem:[#allocation5 + $0xa] sm:$0xff]
        %v1459 = vld [vmem:[#allocation5 + $0x12] sm:$0x3]
        %1460 = vst [vmem:[#allocation6 + $0x10] sm:$0xff] %v1457
        %1461 = vst [vmem:[#allocation6 + $0x28] sm:$0xff] %v1458
        %1462 = vst [vmem:[#allocation6 + $0x40] sm:$0x3] %v1459
        %v1463 = vld [vmem:[#allocation6] sm:$0xff]
        %v1464 = vld [vmem:[#allocation6 + $0x8] sm:$0xff]
        %v1465 = vld [vmem:[#allocation6 + $0x10] sm:$0xff]
        %v1466 = vld [vmem:[#allocation6 + $0x18] sm:$0xff]
        %v1467 = vld [vmem:[#allocation6 + $0x20] sm:$0xff]
        %v1468 = vld [vmem:[#allocation6 + $0x28] sm:$0xff]
        %v1469 = vld [vmem:[#allocation6 + $0x30] sm:$0x3]
        %v1470 = vld [vmem:[#allocation6 + $0x38] sm:$0x3]
        %v1471 = vld [vmem:[#allocation6 + $0x40] sm:$0x3]
        %s1472 = scalar_lea.vmem [#allocation7], 768
        %v1473 = vld [vmem:[%s1472] sm:$0xff]
        %v1474 = vld [vmem:[%s1472 + $0x8] sm:$0xff]
        %v1475 = vld [vmem:[%s1472 + $0x10] sm:$0xff]
        %v1476 = vld [vmem:[%s1472 + $0x18] sm:$0xff]
        %v1477 = vld [vmem:[%s1472 + $0x20] sm:$0xff]
        %v1478 = vld [vmem:[%s1472 + $0x28] sm:$0xff]
        %v1479 = vld [vmem:[%s1472 + $0x30] sm:$0xff]
        %v1480 = vld [vmem:[%s1472 + $0x38] sm:$0xff]
        %v1481 = vld [vmem:[%s1472 + $0x40] sm:$0xff]
        %v1482 = vld [vmem:[%s1472 + $0x48] sm:$0xff]
        %v1483 = vld [vmem:[%s1472 + $0x50] sm:$0xff]
        %v1484 = vld [vmem:[%s1472 + $0x58] sm:$0xff]
        %v1485 = vld [vmem:[%s1472 + $0x60] sm:$0xff]
        %v1486 = vld [vmem:[%s1472 + $0x68] sm:$0xff]
        %v1487 = vld [vmem:[%s1472 + $0x70] sm:$0xff]
        %v1488 = vld [vmem:[%s1472 + $0x78] sm:$0xff]
        %v1489 = vld [vmem:[%s1472 + $0x80] sm:$0xff]
        %v1490 = vld [vmem:[%s1472 + $0x88] sm:$0xff]
        %v1491 = vld [vmem:[%s1472 + $0x90] sm:$0xff]
        %v1492 = vld [vmem:[%s1472 + $0x98] sm:$0xff]
        %v1493 = vld [vmem:[%s1472 + $0xa0] sm:$0xff]
        %v1494 = vld [vmem:[%s1472 + $0xa8] sm:$0xff]
        %v1495 = vld [vmem:[%s1472 + $0xb0] sm:$0xff]
        %v1496 = vld [vmem:[%s1472 + $0xb8] sm:$0xff]
        %v1497 = vld [vmem:[%s1472 + $0xc0] sm:$0xff]
        %v1498 = vld [vmem:[%s1472 + $0xc8] sm:$0xff]
        %v1499 = vld [vmem:[%s1472 + $0xd0] sm:$0xff]
        %v1500 = vld [vmem:[%s1472 + $0xd8] sm:$0xff]
        %v1501 = vld [vmem:[%s1472 + $0xe0] sm:$0xff]
        %v1502 = vld [vmem:[%s1472 + $0xe8] sm:$0xff]
        %v1503 = vld [vmem:[%s1472 + $0xf0] sm:$0xff]
        %v1504 = vld [vmem:[%s1472 + $0xf8] sm:$0xff]
        %v1505 = vld [vmem:[%s1472 + $0x100] sm:$0xff]
        %v1506 = vld [vmem:[%s1472 + $0x108] sm:$0xff]
        %v1507 = vld [vmem:[%s1472 + $0x110] sm:$0xff]
        %v1508 = vld [vmem:[%s1472 + $0x118] sm:$0xff]
        %v1509 = vld [vmem:[%s1472 + $0x120] sm:$0xff]
        %v1510 = vld [vmem:[%s1472 + $0x128] sm:$0xff]
        %v1511 = vld [vmem:[%s1472 + $0x130] sm:$0xff]
        %v1512 = vld [vmem:[%s1472 + $0x138] sm:$0xff]
        %v1513 = vld [vmem:[%s1472 + $0x140] sm:$0xff]
        %v1514 = vld [vmem:[%s1472 + $0x148] sm:$0xff]
        %v1515 = vld [vmem:[%s1472 + $0x150] sm:$0xff]
        %v1516 = vld [vmem:[%s1472 + $0x158] sm:$0xff]
        %v1517 = vld [vmem:[%s1472 + $0x160] sm:$0xff]
        %v1518 = vld [vmem:[%s1472 + $0x168] sm:$0xff]
        %v1519 = vld [vmem:[%s1472 + $0x170] sm:$0xff]
        %v1520 = vld [vmem:[%s1472 + $0x178] sm:$0xff]
        %s1521 = scalar_lea.vmem %s6, 2
        %v1522 = vld [vmem:[%s1521] sm:$0x1]
        %v1524 = vlaneseq
        %v1525 = vshrl.u32 %v1524, 7
        %v1526 = vsub.s32 0, %v1525
        %v1527 = vrot.slane %v1522, %v1526
        %1529 = vmatprep.subr.mxu0 0.0
        %1530 = vmatpush1.msra.mxu0 %v1488
        %1531 = vmatprep.subr.mxu0 0.0
        %1532 = vmatpush1.msra.mxu0 %v1487
        %1533 = vmatprep.subr.mxu0 0.0
        %1534 = vmatpush1.msra.mxu0 %v1486
        %1535 = vmatprep.subr.mxu0 0.0
        %1536 = vmatpush1.msra.mxu0 %v1485
        %1537 = vmatprep.subr.mxu0 0.0
        %1538 = vmatpush1.msra.mxu0 %v1484
        %1539 = vmatprep.subr.mxu0 0.0
        %1540 = vmatpush1.msra.mxu0 %v1483
        %1541 = vmatprep.subr.mxu0 0.0
        %1542 = vmatpush1.msra.mxu0 %v1482
        %1543 = vmatprep.subr.mxu0 0.0
        %1544 = vmatpush1.msra.mxu0 %v1481
        %1545 = vmatprep.subr.mxu0 0.0
        %1546 = vmatpush1.msra.mxu0 %v1480
        %1547 = vmatprep.subr.mxu0 0.0
        %1548 = vmatpush1.msra.mxu0 %v1479
        %1549 = vmatprep.subr.mxu0 0.0
        %1550 = vmatpush1.msra.mxu0 %v1478
        %1551 = vmatprep.subr.mxu0 0.0
        %1552 = vmatpush1.msra.mxu0 %v1477
        %1553 = vmatprep.subr.mxu0 0.0
        %1554 = vmatpush1.msra.mxu0 %v1476
        %1555 = vmatprep.subr.mxu0 0.0
        %1556 = vmatpush1.msra.mxu0 %v1475
        %1557 = vmatprep.subr.mxu0 0.0
        %1558 = vmatpush1.msra.mxu0 %v1474
        %1559 = vmatprep.subr.mxu0 0.0
        %1560 = vmatpush1.msra.mxu0 %v1473
        %1561 = vmatprep.subr.mxu0 0.0
        %1562 = vmatpush2.msra.mxu0 %v1504
        %1563 = vmatprep.subr.mxu0 0.0
        %1564 = vmatpush2.msra.mxu0 %v1503
        %1565 = vmatprep.subr.mxu0 0.0
        %1566 = vmatpush2.msra.mxu0 %v1502
        %1567 = vmatprep.subr.mxu0 0.0
        %1568 = vmatpush2.msra.mxu0 %v1501
        %1569 = vmatprep.subr.mxu0 0.0
        %1570 = vmatpush2.msra.mxu0 %v1500
        %1571 = vmatprep.subr.mxu0 0.0
        %1572 = vmatpush2.msra.mxu0 %v1499
        %1573 = vmatprep.subr.mxu0 0.0
        %1574 = vmatpush2.msra.mxu0 %v1498
        %1575 = vmatprep.subr.mxu0 0.0
        %1576 = vmatpush2.msra.mxu0 %v1497
        %1577 = vmatprep.subr.mxu0 0.0
        %1578 = vmatpush2.msra.mxu0 %v1496
        %1579 = vmatprep.subr.mxu0 0.0
        %1580 = vmatpush2.msra.mxu0 %v1495
        %1581 = vmatprep.subr.mxu0 0.0
        %1582 = vmatpush2.msra.mxu0 %v1494
        %1583 = vmatprep.subr.mxu0 0.0
        %1584 = vmatpush2.msra.mxu0 %v1493
        %1585 = vmatprep.subr.mxu0 0.0
        %1586 = vmatpush2.msra.mxu0 %v1492
        %1587 = vmatprep.subr.mxu0 0.0
        %1588 = vmatpush2.msra.mxu0 %v1491
        %1589 = vmatprep.subr.mxu0 0.0
        %1590 = vmatpush2.msra.mxu0 %v1490
        %1591 = vmatprep.subr.mxu0 0.0
        %1592 = vmatpush2.msra.mxu0 %v1489
        %1593 = vmatprep.mubr.f32.mxu0 %v1464
        %1594 = vmatmul.mubr.f32.gmra.mxu0 %v1463
        %v1595 = vpop.f32.mrf.mxu0
        %v1596 = vadd.f32 %v1527, %v1595
        %v1597 = vpop.f32.mrf.mxu0
        %1598 = vmatprep.mubr.f32.mxu0 %v1467
        %1599 = vmatmul.mubr.f32.gmra.mxu0 %v1466
        %v1600 = vpop.f32.mrf.mxu0
        %v1601 = vadd.f32 %v1527, %v1600
        %v1602 = vpop.f32.mrf.mxu0
        %1603 = vmatprep.mubr.f32.mxu0 %v1470
        %1604 = vmatmul.mubr.f32.gmra.mxu0 %v1469
        %v1605 = vpop.f32.mrf.mxu0
        %v1606 = vadd.f32 %v1527, %v1605
        %v1607 = vpop.f32.mrf.mxu0
        %1608 = vdwg.mxu0
        %1609 = vmatprep.subr.mxu0 0.0
        %1610 = vmatpush1.msra.mxu0 %v1520
        %1611 = vmatprep.subr.mxu0 0.0
        %1612 = vmatpush1.msra.mxu0 %v1519
        %1613 = vmatprep.subr.mxu0 0.0
        %1614 = vmatpush1.msra.mxu0 %v1518
        %1615 = vmatprep.subr.mxu0 0.0
        %1616 = vmatpush1.msra.mxu0 %v1517
        %1617 = vmatprep.subr.mxu0 0.0
        %1618 = vmatpush1.msra.mxu0 %v1516
        %1619 = vmatprep.subr.mxu0 0.0
        %1620 = vmatpush1.msra.mxu0 %v1515
        %1621 = vmatprep.subr.mxu0 0.0
        %1622 = vmatpush1.msra.mxu0 %v1514
        %1623 = vmatprep.subr.mxu0 0.0
        %1624 = vmatpush1.msra.mxu0 %v1513
        %1625 = vmatprep.subr.mxu0 0.0
        %1626 = vmatpush1.msra.mxu0 %v1512
        %1627 = vmatprep.subr.mxu0 0.0
        %1628 = vmatpush1.msra.mxu0 %v1511
        %1629 = vmatprep.subr.mxu0 0.0
        %1630 = vmatpush1.msra.mxu0 %v1510
        %1631 = vmatprep.subr.mxu0 0.0
        %1632 = vmatpush1.msra.mxu0 %v1509
        %1633 = vmatprep.subr.mxu0 0.0
        %1634 = vmatpush1.msra.mxu0 %v1508
        %1635 = vmatprep.subr.mxu0 0.0
        %1636 = vmatpush1.msra.mxu0 %v1507
        %1637 = vmatprep.subr.mxu0 0.0
        %1638 = vmatpush1.msra.mxu0 %v1506
        %1639 = vmatprep.subr.mxu0 0.0
        %1640 = vmatpush1.msra.mxu0 %v1505
        %1641 = vmatprep.subr.mxu0 0.0
        %1642 = vmatpush2.msra.mxu0 0.0
        %1643 = vmatprep.subr.mxu0 0.0
        %1644 = vmatpush2.msra.mxu0 0.0
        %1645 = vmatprep.subr.mxu0 0.0
        %1646 = vmatpush2.msra.mxu0 0.0
        %1647 = vmatprep.subr.mxu0 0.0
        %1648 = vmatpush2.msra.mxu0 0.0
        %1649 = vmatprep.subr.mxu0 0.0
        %1650 = vmatpush2.msra.mxu0 0.0
        %1651 = vmatprep.subr.mxu0 0.0
        %1652 = vmatpush2.msra.mxu0 0.0
        %1653 = vmatprep.subr.mxu0 0.0
        %1654 = vmatpush2.msra.mxu0 0.0
        %1655 = vmatprep.subr.mxu0 0.0
        %1656 = vmatpush2.msra.mxu0 0.0
        %1657 = vmatprep.subr.mxu0 0.0
        %1658 = vmatpush2.msra.mxu0 0.0
        %1659 = vmatprep.subr.mxu0 0.0
        %1660 = vmatpush2.msra.mxu0 0.0
        %1661 = vmatprep.subr.mxu0 0.0
        %1662 = vmatpush2.msra.mxu0 0.0
        %1663 = vmatprep.subr.mxu0 0.0
        %1664 = vmatpush2.msra.mxu0 0.0
        %1665 = vmatprep.subr.mxu0 0.0
        %1666 = vmatpush2.msra.mxu0 0.0
        %1667 = vmatprep.subr.mxu0 0.0
        %1668 = vmatpush2.msra.mxu0 0.0
        %1669 = vmatprep.subr.mxu0 0.0
        %1670 = vmatpush2.msra.mxu0 0.0
        %1671 = vmatprep.subr.mxu0 0.0
        %1672 = vmatpush2.msra.mxu0 0.0
        %1673 = vmatprep.mubr.f32.mxu0 0.0
        %1674 = vmatmul.mubr.f32.gmra.mxu0 %v1465
        %v1675 = vpop.f32.mrf.mxu0
        %v1676 = vadd.f32 %v1596, %v1675
        %v1677 = vpop.f32.mrf.mxu0
        %1678 = vmatprep.mubr.f32.mxu0 0.0
        %1679 = vmatmul.mubr.f32.gmra.mxu0 %v1468
        %v1680 = vpop.f32.mrf.mxu0
        %v1681 = vadd.f32 %v1601, %v1680
        %v1682 = vpop.f32.mrf.mxu0
        %1683 = vmatprep.mubr.f32.mxu0 0.0
        %1684 = vmatmul.mubr.f32.gmra.mxu0 %v1471
        %v1685 = vpop.f32.mrf.mxu0
        %v1686 = vadd.f32 %v1606, %v1685
        %v1687 = vpop.f32.mrf.mxu0
        %1688 = vdwg.mxu0
        %v1689 = vmax.f32 %v1676, 0.0
        %v1690 = vmax.f32 %v1681, 0.0
        %v1691 = vmax.f32 %v1686, 0.0
        %1692 = vst [vmem:[#allocation3] sm:$0xff] %v1689
        %1693 = vst [vmem:[#allocation3 + $0x8] sm:$0xff] %v1690
        %1694 = vst [vmem:[#allocation3 + $0x10] sm:$0x3] %v1691
        // Predicated region
        $region69: #{tpu_custom_call.1} parent=47 // pred_check
          %p1695 = pneg %p443
        $region70: #{tpu_custom_call.1} parent=47 // pred_check_branch
          %1697 = sbr.rel (%p1695) target = $region72
        $region71: #{tpu_custom_call.1} parent=47 // pred_region
          %v1698 = vld [vmem:[#allocation3] sm:$0xff]
          %v1699 = vld [vmem:[#allocation3 + $0x8] sm:$0xff]
          %v1700 = vld [vmem:[#allocation3 + $0x10] sm:$0x3]
          %s1701 = ssub.s32 %s437, 1
          %v1702 = vlaneseq
          %v1703 = vshrl.u32 %v1702, 7
          %v1704 = vadd.s32 %v1703, 8
          %v1705 = vadd.s32 %v1703, 16
          %v1706 = vstv %s1701
          %v1707 = vadd.s32 %v1706, %v1703
          %v1708 = vadd.s32 %v1706, %v1704
          %v1709 = vadd.s32 %v1706, %v1705
          %vm1710 = vcmp.ge.s32.totalorder %v1707, 0
          %vm1711 = vcmp.ge.s32.totalorder %v1708, 0
          %vm1712 = vcmp.ge.s32.totalorder %v1709, 0
          %vm1713 = vcmp.lt.s32.totalorder %v1707, 16
          %vm1714 = vcmp.lt.s32.totalorder %v1708, 16
          %vm1715 = vcmp.lt.s32.totalorder %v1709, 16
          %vm1716 = vmand %vm1710, %vm1713
          %vm1717 = vmand %vm1711, %vm1714
          %vm1718 = vmand %vm1712, %vm1715
          %v1719 = vsel %vm1716, 1, 0
          %v1720 = vsel %vm1717, 1, 0
          %v1721 = vsel %vm1718, 1, 0
          %vm1722 = vcmp.eq.s32.totalorder %v1719, 1
          %vm1723 = vcmp.eq.s32.totalorder %v1720, 1
          %vm1724 = vcmp.eq.s32.totalorder %v1721, 1
          %v1725 = vsel %vm1722, %v1698, 0.0
          %v1726 = vsel %vm1723, %v1699, 0.0
          %v1727 = vsel %vm1724, %v1700, 0.0
          %1728 = vst [vmem:[#allocation3] sm:$0xff] %v1725
          %1729 = vst [vmem:[#allocation3 + $0x8] sm:$0xff] %v1726
          %1730 = vst [vmem:[#allocation3 + $0x10] sm:$0x3] %v1727
        $region72: #{tpu_custom_call.1} parent=47 // pred_fallthru
          _
        %v1731 = vld [vmem:[#allocation3] sm:$0xff]
        %v1732 = vld [vmem:[#allocation3 + $0x8] sm:$0xff]
        %1733 = vst [vmem:[#allocation6] sm:$0xff] %v1731
        %1734 = vst [vmem:[#allocation6 + $0x18] sm:$0xff] %v1732
        %v1735 = vld [vmem:[#allocation3 + $0x1] sm:$0xff]
        %v1736 = vld [vmem:[#allocation3 + $0x9] sm:$0xff]
        %1737 = vst [vmem:[#allocation6 + $0x8] sm:$0xff] %v1735
        %1738 = vst [vmem:[#allocation6 + $0x20] sm:$0xff] %v1736
        %v1739 = vld [vmem:[#allocation3 + $0x2] sm:$0xff]
        %v1740 = vld [vmem:[#allocation3 + $0xa] sm:$0xff]
        %1741 = vst [vmem:[#allocation6 + $0x10] sm:$0xff] %v1739
        %1742 = vst [vmem:[#allocation6 + $0x28] sm:$0xff] %v1740
        %v1743 = vld [vmem:[#allocation6] sm:$0xff]
        %v1744 = vld [vmem:[#allocation6 + $0x8] sm:$0xff]
        %v1745 = vld [vmem:[#allocation6 + $0x10] sm:$0xff]
        %v1746 = vld [vmem:[#allocation6 + $0x18] sm:$0xff]
        %v1747 = vld [vmem:[#allocation6 + $0x20] sm:$0xff]
        %v1748 = vld [vmem:[#allocation6 + $0x28] sm:$0xff]
        %s1749 = scalar_lea.vmem [#allocation7], 1152
        %v1750 = vld [vmem:[%s1749] sm:$0xff]
        %v1751 = vld [vmem:[%s1749 + $0x8] sm:$0xff]
        %v1752 = vld [vmem:[%s1749 + $0x10] sm:$0xff]
        %v1753 = vld [vmem:[%s1749 + $0x18] sm:$0xff]
        %v1754 = vld [vmem:[%s1749 + $0x20] sm:$0xff]
        %v1755 = vld [vmem:[%s1749 + $0x28] sm:$0xff]
        %v1756 = vld [vmem:[%s1749 + $0x30] sm:$0xff]
        %v1757 = vld [vmem:[%s1749 + $0x38] sm:$0xff]
        %v1758 = vld [vmem:[%s1749 + $0x40] sm:$0xff]
        %v1759 = vld [vmem:[%s1749 + $0x48] sm:$0xff]
        %v1760 = vld [vmem:[%s1749 + $0x50] sm:$0xff]
        %v1761 = vld [vmem:[%s1749 + $0x58] sm:$0xff]
        %v1762 = vld [vmem:[%s1749 + $0x60] sm:$0xff]
        %v1763 = vld [vmem:[%s1749 + $0x68] sm:$0xff]
        %v1764 = vld [vmem:[%s1749 + $0x70] sm:$0xff]
        %v1765 = vld [vmem:[%s1749 + $0x78] sm:$0xff]
        %v1766 = vld [vmem:[%s1749 + $0x80] sm:$0xff]
        %v1767 = vld [vmem:[%s1749 + $0x88] sm:$0xff]
        %v1768 = vld [vmem:[%s1749 + $0x90] sm:$0xff]
        %v1769 = vld [vmem:[%s1749 + $0x98] sm:$0xff]
        %v1770 = vld [vmem:[%s1749 + $0xa0] sm:$0xff]
        %v1771 = vld [vmem:[%s1749 + $0xa8] sm:$0xff]
        %v1772 = vld [vmem:[%s1749 + $0xb0] sm:$0xff]
        %v1773 = vld [vmem:[%s1749 + $0xb8] sm:$0xff]
        %v1774 = vld [vmem:[%s1749 + $0xc0] sm:$0xff]
        %v1775 = vld [vmem:[%s1749 + $0xc8] sm:$0xff]
        %v1776 = vld [vmem:[%s1749 + $0xd0] sm:$0xff]
        %v1777 = vld [vmem:[%s1749 + $0xd8] sm:$0xff]
        %v1778 = vld [vmem:[%s1749 + $0xe0] sm:$0xff]
        %v1779 = vld [vmem:[%s1749 + $0xe8] sm:$0xff]
        %v1780 = vld [vmem:[%s1749 + $0xf0] sm:$0xff]
        %v1781 = vld [vmem:[%s1749 + $0xf8] sm:$0xff]
        %v1782 = vld [vmem:[%s1749 + $0x100] sm:$0xff]
        %v1783 = vld [vmem:[%s1749 + $0x108] sm:$0xff]
        %v1784 = vld [vmem:[%s1749 + $0x110] sm:$0xff]
        %v1785 = vld [vmem:[%s1749 + $0x118] sm:$0xff]
        %v1786 = vld [vmem:[%s1749 + $0x120] sm:$0xff]
        %v1787 = vld [vmem:[%s1749 + $0x128] sm:$0xff]
        %v1788 = vld [vmem:[%s1749 + $0x130] sm:$0xff]
        %v1789 = vld [vmem:[%s1749 + $0x138] sm:$0xff]
        %v1790 = vld [vmem:[%s1749 + $0x140] sm:$0xff]
        %v1791 = vld [vmem:[%s1749 + $0x148] sm:$0xff]
        %v1792 = vld [vmem:[%s1749 + $0x150] sm:$0xff]
        %v1793 = vld [vmem:[%s1749 + $0x158] sm:$0xff]
        %v1794 = vld [vmem:[%s1749 + $0x160] sm:$0xff]
        %v1795 = vld [vmem:[%s1749 + $0x168] sm:$0xff]
        %v1796 = vld [vmem:[%s1749 + $0x170] sm:$0xff]
        %v1797 = vld [vmem:[%s1749 + $0x178] sm:$0xff]
        %s1798 = scalar_lea.vmem %s6, 3
        %v1799 = vld [vmem:[%s1798] sm:$0x1]
        %v1801 = vlaneseq
        %v1802 = vshrl.u32 %v1801, 7
        %v1803 = vsub.s32 0, %v1802
        %v1804 = vrot.slane %v1799, %v1803
        %1806 = vmatprep.subr.mxu0 0.0
        %1807 = vmatpush1.msra.mxu0 %v1765
        %1808 = vmatprep.subr.mxu0 0.0
        %1809 = vmatpush1.msra.mxu0 %v1764
        %1810 = vmatprep.subr.mxu0 0.0
        %1811 = vmatpush1.msra.mxu0 %v1763
        %1812 = vmatprep.subr.mxu0 0.0
        %1813 = vmatpush1.msra.mxu0 %v1762
        %1814 = vmatprep.subr.mxu0 0.0
        %1815 = vmatpush1.msra.mxu0 %v1761
        %1816 = vmatprep.subr.mxu0 0.0
        %1817 = vmatpush1.msra.mxu0 %v1760
        %1818 = vmatprep.subr.mxu0 0.0
        %1819 = vmatpush1.msra.mxu0 %v1759
        %1820 = vmatprep.subr.mxu0 0.0
        %1821 = vmatpush1.msra.mxu0 %v1758
        %1822 = vmatprep.subr.mxu0 0.0
        %1823 = vmatpush1.msra.mxu0 %v1757
        %1824 = vmatprep.subr.mxu0 0.0
        %1825 = vmatpush1.msra.mxu0 %v1756
        %1826 = vmatprep.subr.mxu0 0.0
        %1827 = vmatpush1.msra.mxu0 %v1755
        %1828 = vmatprep.subr.mxu0 0.0
        %1829 = vmatpush1.msra.mxu0 %v1754
        %1830 = vmatprep.subr.mxu0 0.0
        %1831 = vmatpush1.msra.mxu0 %v1753
        %1832 = vmatprep.subr.mxu0 0.0
        %1833 = vmatpush1.msra.mxu0 %v1752
        %1834 = vmatprep.subr.mxu0 0.0
        %1835 = vmatpush1.msra.mxu0 %v1751
        %1836 = vmatprep.subr.mxu0 0.0
        %1837 = vmatpush1.msra.mxu0 %v1750
        %1838 = vmatprep.subr.mxu0 0.0
        %1839 = vmatpush2.msra.mxu0 %v1781
        %1840 = vmatprep.subr.mxu0 0.0
        %1841 = vmatpush2.msra.mxu0 %v1780
        %1842 = vmatprep.subr.mxu0 0.0
        %1843 = vmatpush2.msra.mxu0 %v1779
        %1844 = vmatprep.subr.mxu0 0.0
        %1845 = vmatpush2.msra.mxu0 %v1778
        %1846 = vmatprep.subr.mxu0 0.0
        %1847 = vmatpush2.msra.mxu0 %v1777
        %1848 = vmatprep.subr.mxu0 0.0
        %1849 = vmatpush2.msra.mxu0 %v1776
        %1850 = vmatprep.subr.mxu0 0.0
        %1851 = vmatpush2.msra.mxu0 %v1775
        %1852 = vmatprep.subr.mxu0 0.0
        %1853 = vmatpush2.msra.mxu0 %v1774
        %1854 = vmatprep.subr.mxu0 0.0
        %1855 = vmatpush2.msra.mxu0 %v1773
        %1856 = vmatprep.subr.mxu0 0.0
        %1857 = vmatpush2.msra.mxu0 %v1772
        %1858 = vmatprep.subr.mxu0 0.0
        %1859 = vmatpush2.msra.mxu0 %v1771
        %1860 = vmatprep.subr.mxu0 0.0
        %1861 = vmatpush2.msra.mxu0 %v1770
        %1862 = vmatprep.subr.mxu0 0.0
        %1863 = vmatpush2.msra.mxu0 %v1769
        %1864 = vmatprep.subr.mxu0 0.0
        %1865 = vmatpush2.msra.mxu0 %v1768
        %1866 = vmatprep.subr.mxu0 0.0
        %1867 = vmatpush2.msra.mxu0 %v1767
        %1868 = vmatprep.subr.mxu0 0.0
        %1869 = vmatpush2.msra.mxu0 %v1766
        %1870 = vmatprep.mubr.f32.mxu0 %v1744
        %1871 = vmatmul.mubr.f32.gmra.mxu0 %v1743
        %v1872 = vpop.f32.mrf.mxu0
        %v1873 = vadd.f32 %v1804, %v1872
        %v1874 = vpop.f32.mrf.mxu0
        %1875 = vmatprep.mubr.f32.mxu0 %v1747
        %1876 = vmatmul.mubr.f32.gmra.mxu0 %v1746
        %v1877 = vpop.f32.mrf.mxu0
        %v1878 = vadd.f32 %v1804, %v1877
        %v1879 = vpop.f32.mrf.mxu0
        %1880 = vdwg.mxu0
        %1881 = vmatprep.subr.mxu0 0.0
        %1882 = vmatpush1.msra.mxu0 %v1797
        %1883 = vmatprep.subr.mxu0 0.0
        %1884 = vmatpush1.msra.mxu0 %v1796
        %1885 = vmatprep.subr.mxu0 0.0
        %1886 = vmatpush1.msra.mxu0 %v1795
        %1887 = vmatprep.subr.mxu0 0.0
        %1888 = vmatpush1.msra.mxu0 %v1794
        %1889 = vmatprep.subr.mxu0 0.0
        %1890 = vmatpush1.msra.mxu0 %v1793
        %1891 = vmatprep.subr.mxu0 0.0
        %1892 = vmatpush1.msra.mxu0 %v1792
        %1893 = vmatprep.subr.mxu0 0.0
        %1894 = vmatpush1.msra.mxu0 %v1791
        %1895 = vmatprep.subr.mxu0 0.0
        %1896 = vmatpush1.msra.mxu0 %v1790
        %1897 = vmatprep.subr.mxu0 0.0
        %1898 = vmatpush1.msra.mxu0 %v1789
        %1899 = vmatprep.subr.mxu0 0.0
        %1900 = vmatpush1.msra.mxu0 %v1788
        %1901 = vmatprep.subr.mxu0 0.0
        %1902 = vmatpush1.msra.mxu0 %v1787
        %1903 = vmatprep.subr.mxu0 0.0
        %1904 = vmatpush1.msra.mxu0 %v1786
        %1905 = vmatprep.subr.mxu0 0.0
        %1906 = vmatpush1.msra.mxu0 %v1785
        %1907 = vmatprep.subr.mxu0 0.0
        %1908 = vmatpush1.msra.mxu0 %v1784
        %1909 = vmatprep.subr.mxu0 0.0
        %1910 = vmatpush1.msra.mxu0 %v1783
        %1911 = vmatprep.subr.mxu0 0.0
        %1912 = vmatpush1.msra.mxu0 %v1782
        %1913 = vmatprep.subr.mxu0 0.0
        %1914 = vmatpush2.msra.mxu0 0.0
        %1915 = vmatprep.subr.mxu0 0.0
        %1916 = vmatpush2.msra.mxu0 0.0
        %1917 = vmatprep.subr.mxu0 0.0
        %1918 = vmatpush2.msra.mxu0 0.0
        %1919 = vmatprep.subr.mxu0 0.0
        %1920 = vmatpush2.msra.mxu0 0.0
        %1921 = vmatprep.subr.mxu0 0.0
        %1922 = vmatpush2.msra.mxu0 0.0
        %1923 = vmatprep.subr.mxu0 0.0
        %1924 = vmatpush2.msra.mxu0 0.0
        %1925 = vmatprep.subr.mxu0 0.0
        %1926 = vmatpush2.msra.mxu0 0.0
        %1927 = vmatprep.subr.mxu0 0.0
        %1928 = vmatpush2.msra.mxu0 0.0
        %1929 = vmatprep.subr.mxu0 0.0
        %1930 = vmatpush2.msra.mxu0 0.0
        %1931 = vmatprep.subr.mxu0 0.0
        %1932 = vmatpush2.msra.mxu0 0.0
        %1933 = vmatprep.subr.mxu0 0.0
        %1934 = vmatpush2.msra.mxu0 0.0
        %1935 = vmatprep.subr.mxu0 0.0
        %1936 = vmatpush2.msra.mxu0 0.0
        %1937 = vmatprep.subr.mxu0 0.0
        %1938 = vmatpush2.msra.mxu0 0.0
        %1939 = vmatprep.subr.mxu0 0.0
        %1940 = vmatpush2.msra.mxu0 0.0
        %1941 = vmatprep.subr.mxu0 0.0
        %1942 = vmatpush2.msra.mxu0 0.0
        %1943 = vmatprep.subr.mxu0 0.0
        %1944 = vmatpush2.msra.mxu0 0.0
        %1945 = vmatprep.mubr.f32.mxu0 0.0
        %1946 = vmatmul.mubr.f32.gmra.mxu0 %v1745
        %v1947 = vpop.f32.mrf.mxu0
        %v1948 = vadd.f32 %v1873, %v1947
        %v1949 = vpop.f32.mrf.mxu0
        %1950 = vmatprep.mubr.f32.mxu0 0.0
        %1951 = vmatmul.mubr.f32.gmra.mxu0 %v1748
        %v1952 = vpop.f32.mrf.mxu0
        %v1953 = vadd.f32 %v1878, %v1952
        %v1954 = vpop.f32.mrf.mxu0
        %1955 = vdwg.mxu0
        %v1956 = vmax.f32 %v1948, 0.0
        %v1957 = vmax.f32 %v1953, 0.0
        %v1958 = vld [vmem:[#allocation5 + $0x2] sm:$0xff]
        %v1959 = vld [vmem:[#allocation5 + $0xa] sm:$0xff]
        %v1960 = vmul.f32 %v1956, 0.1
        %v1961 = vmul.f32 %v1957, 0.1
        %v1962 = vadd.f32 %v1958, %v1960
        %v1963 = vadd.f32 %v1959, %v1961
        %1964 = vst [vmem:[#allocation4] sm:$0xff] %v1962
        %1965 = vst [vmem:[#allocation4 + $0x8] sm:$0xff] %v1963
        // Predicated region
        $region73: #{tpu_custom_call.1} parent=47 // pred_check
          %p1966 = pneg %p443
        $region74: #{tpu_custom_call.1} parent=47 // pred_check_branch
          %1968 = sbr.rel (%p1966) target = $region76
        $region75: #{tpu_custom_call.1} parent=47 // pred_region
          %v1969 = vld [vmem:[#allocation4] sm:$0xff]
          %v1970 = vld [vmem:[#allocation4 + $0x8] sm:$0xff]
          %v1971 = vlaneseq
          %v1972 = vshrl.u32 %v1971, 7
          %v1973 = vadd.s32 %v1972, 8
          %v1974 = vstv %s437
          %v1975 = vadd.s32 %v1974, %v1972
          %v1976 = vadd.s32 %v1974, %v1973
          %vm1977 = vcmp.ge.s32.totalorder %v1975, 0
          %vm1978 = vcmp.ge.s32.totalorder %v1976, 0
          %vm1979 = vcmp.lt.s32.totalorder %v1975, 16
          %vm1980 = vcmp.lt.s32.totalorder %v1976, 16
          %vm1981 = vmand %vm1977, %vm1979
          %vm1982 = vmand %vm1978, %vm1980
          %v1983 = vsel %vm1981, 1, 0
          %v1984 = vsel %vm1982, 1, 0
          %vm1985 = vcmp.eq.s32.totalorder %v1983, 1
          %vm1986 = vcmp.eq.s32.totalorder %v1984, 1
          %v1987 = vsel %vm1985, %v1969, 0.0
          %v1988 = vsel %vm1986, %v1970, 0.0
          %1989 = vst [vmem:[#allocation4] sm:$0xff] %v1987
          %1990 = vst [vmem:[#allocation4 + $0x8] sm:$0xff] %v1988
        $region76: #{tpu_custom_call.1} parent=47 // pred_fallthru
          _
        %v1991 = vld [vmem:[#allocation4] sm:$0xff]
        %v1992 = vld [vmem:[#allocation4 + $0x8] sm:$0xff]
        %1993 = vst [vmem:[%s393] sm:$0xff] %v1991
        %1994 = vst [vmem:[%s393 + $0x8] sm:$0xff] %v1992
        %s1995 = sand.u32 %s224, 1
        %s1996 = scalar_lea.sflag [#allocation9], %s1995
        %s1997 = sand.u32 %s224, 1
        %s1998 = smul.addr %s1997, 16
        %s1999 = scalar_lea.vmem [#allocation10], %s1998
        // Predicated region
        $region77: #{tpu_custom_call.1} parent=47 // pred_check
          %p2000 = pneg %p234
        $region78: #{tpu_custom_call.1} parent=47 // pred_check_branch
          %2002 = sbr.rel (%p2000) target = $region80
        $region79: #{tpu_custom_call.1} parent=47 // pred_region
          %s2003 = smul.u32 2, %s27
          %s2005 = ssub.s32 256, 256
          %2006 = vsyncadd %s1996, %s2005
          %s2007 = smul.addr %s26, 2
          %s2008 = sadd.s32 %s2003, %s2007
          %s2009 = smul.addr %s2008, 128
          %s2010 = scalar_lea.hbm %s7, %s2009
          %s2011 = sshll.u32 %s1999, 4
          %s2012 = int_to_ptr.vmem [resolvable:$true] %s2011
          %2017 = dma.vmem_to_hbm [thread:$0]  %s2012, 256, %s2010, %s1996, 128, 128, 8
        $region80: #{tpu_custom_call.1} parent=47 // pred_fallthru
          _
      $region48: #{tpu_custom_call.1} parent=5 // pred_fallthru
        _
      %p2018 = scmp.le.s32.totalorder 2, %s17
      // Predicated region
      $region81: #{tpu_custom_call.1} parent=5 // pred_check
        %p2019 = pneg %p2018
      $region82: #{tpu_custom_call.1} parent=5 // pred_check_branch
        %2021 = sbr.rel (%p2019) target = $region84
      $region83: #{tpu_custom_call.1} parent=5 // pred_region
        %s2022 = ssub.s32 %s17, 2
        // Predicated region
        $region85: #{tpu_custom_call.1} parent=83 // pred_check
          %p2023 = pneg %p240
        $region86: #{tpu_custom_call.1} parent=83 // pred_check_branch
          %2025 = sbr.rel (%p2023) target = $region88
        $region87: #{tpu_custom_call.1} parent=83 // pred_region
          %s2026 = sand.u32 %s225, 1
          %s2027 = scalar_lea.sflag [#allocation9], %s2026
          %s2028 = sand.u32 %s225, 1
          %s2029 = smul.addr %s2028, 16
          %s2030 = scalar_lea.vmem [#allocation10], %s2029
          %2031 = dma.done %s2027, 256
        $region88: #{tpu_custom_call.1} parent=83 // pred_fallthru
          _
      $region84: #{tpu_custom_call.1} parent=5 // pred_fallthru
        _
    $region6: #{tpu_custom_call.1} parent=1 // loop_footer
      %s21 = sadd.s32 1, %s17
    $region7: #{tpu_custom_call.1} parent=1 // loop_footer_branch
      %16 = sbr.rel target = $region3
    $region8: #{tpu_custom_call.1} parent=1 // loop_exit
      _
    %2032 = vsyncpa [#allocation8], 1
    %s2033 = scalar_lea.sflag [#allocation8], 1
    %2034 = vsyncpa %s2033, 1
    %2035 = vsyncpa [#allocation9], 1
    %s2036 = scalar_lea.sflag [#allocation9], 1
    %2037 = vsyncpa %s2036, 1

</llo_original>
